<compile_context>
chip_gen: v7x
topology: tpu7x:2x2x1
jax: 0.10.0
libtpu: 0.0.40
codegen_flags: <defaults>
</compile_context>

<pallas_src>
import functools

import jax
import jax.numpy as jnp
from jax.experimental import pallas as pl
from jax.experimental.pallas import tpu as pltpu


_NEG_BIG = -1e30  # padding value for unused classifier lanes: exp() -> 0 in f32


def _gelu_tanh(x):
    # TODO(synk): the reference uses an undefined custom `GELU()`; we use the
    # standard tanh-approximate GELU (torch nn.GELU default is the erf form).
    c = 0.7978845608028654  # sqrt(2/pi)
    return 0.5 * x * (1.0 + jnp.tanh(c * (x + 0.044715 * x * x * x)))


def block_selector_kernel(
    x_ref,      # (S, D)        flattened sequence
    w_ref,      # (3D+H, LW)    packed: [Wqkv(D,3D); Wo(D,D); W1(D,H); W2p(H,Opad)]
    b_ref,      # (4, LW)       rows: bqkv(3D) | bo(D) | b1(H) | b2p(Opad)
    out_ref,    # (1, Opad)     lane-padded softmax output
    *,
    num_heads: int,
    D: int,
    H: int,
    O_pad: int,
):
    x = x_ref[...]                       # (S, D) f32
    hd = D // num_heads

    # ---- fused QKV projection (1/sqrt(hd) already folded into the Q block) ----
    wqkv = w_ref[0:D, 0:3 * D]                                        # (D, 3D)
    qkv = jnp.dot(x, wqkv, preferred_element_type=jnp.float32)        # (S, 3D)
    qkv = qkv + b_ref[0:1, 0:3 * D]

    q_all = qkv[:, 0:D]                                               # (S, D)
    kT_all = qkv[:, D:2 * D].T                                        # (D, S)  single transpose
    v_all = qkv[:, 2 * D:3 * D]                                       # (S, D)

    # ---- per-head attention with the mean-pool commuted before p@v / Wo ----
    # mean_rows(p @ v) == mean_rows(p) @ v, and mean commutes with concat/@Wo,
    # so we accumulate the pooled (1, D) vector directly.
    pooled = b_ref[1:2, 0:D]                                          # (1, D) = bo
    for h in range(num_heads):
        qh = q_all[:, h * hd:(h + 1) * hd]                            # (S, hd)  lane slice
        kTh = kT_all[h * hd:(h + 1) * hd, :]                          # (hd, S)  sublane-aligned slice
        vh = v_all[:, h * hd:(h + 1) * hd]                            # (S, hd)

        s = jnp.dot(qh, kTh, preferred_element_type=jnp.float32)      # (S, S)
        s = s - jnp.max(s, axis=-1, keepdims=True)
        e = jnp.exp(s)
        r = pl.reciprocal(jnp.sum(e, axis=-1, keepdims=True), approx=True)
        pbar = jnp.mean(e * r, axis=0, keepdims=True)                 # (1, S)

        ctx = jnp.dot(pbar, vh, preferred_element_type=jnp.float32)   # (1, hd)
        wo_h = w_ref[D + h * hd:D + (h + 1) * hd, 0:D]                # (hd, D)
        pooled = pooled + jnp.dot(ctx, wo_h, preferred_element_type=jnp.float32)

    # ---- MLP head: Linear -> GELU -> Linear (1/temperature folded into W2/b2) ----
    w1 = w_ref[2 * D:3 * D, 0:H]                                      # (D, H)
    h1 = jnp.dot(pooled, w1, preferred_element_type=jnp.float32) + b_ref[2:3, 0:H]
    h1 = _gelu_tanh(h1)
    w2 = w_ref[3 * D:3 * D + H, 0:O_pad]                              # (H, Opad)
    logits = jnp.dot(h1, w2, preferred_element_type=jnp.float32) + b_ref[3:4, 0:O_pad]
    # padded logit lanes hold -1e30 -> exp() == 0 -> they drop out of the softmax

    # ---- softmax over the lane-dense padded logits ----
    logits = logits - jnp.max(logits, axis=-1, keepdims=True)
    e = jnp.exp(logits)
    out_ref[...] = e * pl.reciprocal(jnp.sum(e, axis=-1, keepdims=True), approx=True)


def pack_params(torch_params, *, num_heads, temperature):
    """Host-side re-layout & constant folding (done once, outside the kernel).

    - transposes all weights to (in, out)
    - fuses Wq/Wk/Wv into one (D, 3D) block, folding 1/sqrt(head_dim) into the
      Q weight+bias
    - folds 1/temperature into the classifier weight+bias (if temperature > 0)
    - lane-pads the classifier to a 128-multiple output width (padding bias is
      -1e30 so it vanishes under softmax)
    - packs all weights into one array and all biases into another, so the
      kernel takes only 3 operands.
    """
    (in_w, in_b, out_w, out_b, fc1_w, fc1_b, fc2_w, fc2_b) = torch_params
    D = out_w.shape[0]
    O, H = fc2_w.shape
    hd = D // num_heads
    scale = 1.0 / float(hd) ** 0.5

    wq = in_w[0:D].T * scale
    wk = in_w[D:2 * D].T
    wv = in_w[2 * D:3 * D].T
    bq = in_b[0:D] * scale
    bk = in_b[D:2 * D]
    bv = in_b[2 * D:3 * D]
    wo = out_w.T
    bo = out_b
    w1 = fc1_w.T
    b1 = fc1_b
    w2 = fc2_w.T
    b2 = fc2_b
    if temperature > 0.0:
        w2 = w2 / temperature
        b2 = b2 / temperature

    O_pad = ((O + 127) // 128) * 128
    w2p = jnp.zeros((H, O_pad), jnp.float32).at[:, :O].set(w2)
    b2p = jnp.full((O_pad,), _NEG_BIG, jnp.float32).at[:O].set(b2)

    LW = max(3 * D, H, O_pad)
    w_pack = jnp.zeros((3 * D + H, LW), jnp.float32)
    w_pack = w_pack.at[0:D, 0:3 * D].set(jnp.concatenate([wq, wk, wv], axis=1))
    w_pack = w_pack.at[D:2 * D, 0:D].set(wo)
    w_pack = w_pack.at[2 * D:3 * D, 0:H].set(w1)
    w_pack = w_pack.at[3 * D:3 * D + H, 0:O_pad].set(w2p)

    b_pack = jnp.zeros((4, LW), jnp.float32)
    b_pack = b_pack.at[0, 0:3 * D].set(jnp.concatenate([bq, bk, bv]))
    b_pack = b_pack.at[1, 0:D].set(bo)
    b_pack = b_pack.at[2, 0:H].set(b1)
    b_pack = b_pack.at[3, 0:O_pad].set(b2p)

    dims = dict(D=D, H=H, O=O, O_pad=O_pad)
    return w_pack, b_pack, dims


def block_selector(x, w_pack, b_pack, *, num_heads, D, H, O, O_pad):
    """x: (var1, var2, D) float32 -> (O,) float32 (matches torch .squeeze(0))."""
    var1, var2, Dx = x.shape
    assert Dx == D
    S = var1 * var2
    x2 = x.reshape(S, D).astype(jnp.float32)

    kernel = functools.partial(
        block_selector_kernel, num_heads=num_heads, D=D, H=H, O_pad=O_pad)
    vmem = pl.BlockSpec(memory_space=pltpu.MemorySpace.VMEM)

    out = pl.pallas_call(
        kernel,
        out_shape=jax.ShapeDtypeStruct((1, O_pad), jnp.float32),
        in_specs=[vmem, vmem, vmem],
        out_specs=vmem,
    )(x2, w_pack, b_pack)
    return out[0, :O]            # drop the lane padding outside the kernel


def init_params(key, input_dim, hidden_dim, output_dim):
    """Deterministic synthetic parameters in PyTorch layout (BlockSelector.__init__)."""
    D, H, O = input_dim, hidden_dim, output_dim
    ks = jax.random.split(key, 8)
    in_proj_w = jax.random.normal(ks[0], (3 * D, D), jnp.float32) * 0.05
    in_proj_b = jax.random.normal(ks[1], (3 * D,), jnp.float32) * 0.01
    out_proj_w = jax.random.normal(ks[2], (D, D), jnp.float32) * 0.05
    out_proj_b = jax.random.normal(ks[3], (D,), jnp.float32) * 0.01
    fc1_w = jax.random.normal(ks[4], (H, D), jnp.float32) * 0.05
    fc1_b = jax.random.normal(ks[5], (H,), jnp.float32) * 0.01
    fc2_w = jax.random.normal(ks[6], (O, H), jnp.float32) * 0.05
    fc2_b = jax.random.normal(ks[7], (O,), jnp.float32) * 0.01
    return (in_proj_w, in_proj_b, out_proj_w, out_proj_b,
            fc1_w, fc1_b, fc2_w, fc2_b)


def block_selector_ref(x, torch_params, *, num_heads, temperature):
    """Pure-JAX reference of the PyTorch forward (un-fused, exact division)."""
    (in_w, in_b, out_w, out_b, fc1_w, fc1_b, fc2_w, fc2_b) = torch_params
    var1, var2, D = x.shape
    S = var1 * var2
    hd = D // num_heads
    xs = x.reshape(S, D)
    q = xs @ in_w[0:D].T + in_b[0:D]
    k = xs @ in_w[D:2 * D].T + in_b[D:2 * D]
    v = xs @ in_w[2 * D:3 * D].T + in_b[2 * D:3 * D]
    qh = q.reshape(S, num_heads, hd).transpose(1, 0, 2)
    kh = k.reshape(S, num_heads, hd).transpose(1, 0, 2)
    vh = v.reshape(S, num_heads, hd).transpose(1, 0, 2)
    s = jnp.einsum("hqd,hkd->hqk", qh, kh) / jnp.sqrt(float(hd))
    p = jax.nn.softmax(s, axis=-1)
    o = jnp.einsum("hqk,hkd->hqd", p, vh).transpose(1, 0, 2).reshape(S, D)
    y = o @ out_w.T + out_b
    pooled = y.mean(axis=0)
    h1 = _gelu_tanh(pooled @ fc1_w.T + fc1_b)
    logits = h1 @ fc2_w.T + fc2_b
    if temperature > 0.0:
        logits = logits / temperature
    return jax.nn.softmax(logits, axis=-1)


if __name__ == "__main__":
    input_dim, hidden_dim, output_dim, num_heads = 32, 64, 8, 4
    temperature = 0.0
    var1, var2 = 2, 8  # sequence length S = 16

    key = jax.random.PRNGKey(0)
    kx, kp = jax.random.split(key)
    x = jax.random.normal(kx, (var1, var2, input_dim), jnp.float32)
    torch_params = init_params(kp, input_dim, hidden_dim, output_dim)

    w_pack, b_pack, dims = pack_params(
        torch_params, num_heads=num_heads, temperature=temperature)

    out = block_selector(x, w_pack, b_pack, num_heads=num_heads, **dims)
    out = jax.block_until_ready(out)

    ref = block_selector_ref(
        x, torch_params, num_heads=num_heads, temperature=temperature)
    assert out.shape == (output_dim,)
    # approx-reciprocal softmax denominators + re-associated pooling introduce
    # ~1e-4-level differences vs. the exact-division f32 reference.
    assert jnp.allclose(out, ref, atol=1e-3, rtol=1e-3), (out, ref)
    print("KERNEL_OK")
</pallas_src>

<mosaic_0001>
module attributes {stable_mosaic.version = 11 : i64} {
  func.func @block_selector_kernel(%arg0: memref<16x32xf32, #tpu.memory_space<vmem>>, %arg1: memref<160x128xf32, #tpu.memory_space<vmem>>, %arg2: memref<4x128xf32, #tpu.memory_space<vmem>>, %arg3: memref<1x128xf32, #tpu.memory_space<vmem>>) attributes {dimension_semantics = [], scalar_prefetch = 0 : i64, scratch_operands = 0 : i64, tpu.core_type = #tpu.core_type<tc>} {
    %c0 = arith.constant 0 : index
    %c0_0 = arith.constant 0 : index
    %0 = vector.load %arg0[%c0, %c0_0] : memref<16x32xf32, #tpu.memory_space<vmem>>, vector<16x32xf32>
    %c0_1 = arith.constant 0 : index
    %c0_2 = arith.constant 0 : index
    %1 = vector.load %arg1[%c0_1, %c0_2] : memref<160x128xf32, #tpu.memory_space<vmem>>, vector<32x96xf32>
    %cst = arith.constant dense<0.000000e+00> : vector<16x96xf32>
    %2 = tpu.matmul %0, %1, %cst {dimension_numbers = #tpu.dot_dimension_numbers<[1], [0], [0], [1], [0, 0, 1, 1], [], []>} : vector<16x32xf32>, vector<32x96xf32>, vector<16x96xf32> -> vector<16x96xf32>
    %c0_3 = arith.constant 0 : index
    %c0_4 = arith.constant 0 : index
    %3 = vector.load %arg2[%c0_3, %c0_4] : memref<4x128xf32, #tpu.memory_space<vmem>>, vector<1x96xf32>
    %4 = vector.broadcast %3 : vector<1x96xf32> to vector<16x96xf32>
    %5 = arith.addf %2, %4 : vector<16x96xf32>
    %6 = vector.extract_strided_slice %5 {offsets = [0, 0], sizes = [16, 32], strides = [1, 1]} : vector<16x96xf32> to vector<16x32xf32>
    %7 = vector.extract_strided_slice %5 {offsets = [0, 32], sizes = [16, 32], strides = [1, 1]} : vector<16x96xf32> to vector<16x32xf32>
    %8 = tpu.transpose %7, [1, 0] : vector<16x32xf32> -> vector<32x16xf32>
    %9 = vector.extract_strided_slice %5 {offsets = [0, 64], sizes = [16, 32], strides = [1, 1]} : vector<16x96xf32> to vector<16x32xf32>
    %c1 = arith.constant 1 : index
    %c0_5 = arith.constant 0 : index
    %10 = vector.load %arg2[%c1, %c0_5] : memref<4x128xf32, #tpu.memory_space<vmem>>, vector<1x32xf32>
    %11 = vector.extract_strided_slice %6 {offsets = [0, 0], sizes = [16, 8], strides = [1, 1]} : vector<16x32xf32> to vector<16x8xf32>
    %12 = vector.extract_strided_slice %8 {offsets = [0, 0], sizes = [8, 16], strides = [1, 1]} : vector<32x16xf32> to vector<8x16xf32>
    %13 = vector.extract_strided_slice %9 {offsets = [0, 0], sizes = [16, 8], strides = [1, 1]} : vector<16x32xf32> to vector<16x8xf32>
    %cst_6 = arith.constant dense<0.000000e+00> : vector<16x16xf32>
    %14 = tpu.matmul %11, %12, %cst_6 {dimension_numbers = #tpu.dot_dimension_numbers<[1], [0], [0], [1], [0, 0, 1, 1], [], []>} : vector<16x8xf32>, vector<8x16xf32>, vector<16x16xf32> -> vector<16x16xf32>
    %cst_7 = arith.constant dense<0xFF800000> : vector<16xf32>
    %15 = vector.multi_reduction <maximumf>, %14, %cst_7 [1] : vector<16x16xf32> to vector<16xf32>
    %16 = vector.shape_cast %15 : vector<16xf32> to vector<16x1xf32>
    %17 = vector.broadcast %16 : vector<16x1xf32> to vector<16x16xf32>
    %18 = arith.subf %14, %17 : vector<16x16xf32>
    %19 = math.exp %18 : vector<16x16xf32>
    %cst_8 = arith.constant dense<0.000000e+00> : vector<16xf32>
    %20 = vector.multi_reduction <add>, %19, %cst_8 [1] : vector<16x16xf32> to vector<16xf32>
    %21 = vector.shape_cast %20 : vector<16xf32> to vector<16x1xf32>
    %22 = tpu.reciprocal %21 {approx = true} : vector<16x1xf32> -> vector<16x1xf32>
    %23 = vector.broadcast %22 : vector<16x1xf32> to vector<16x16xf32>
    %24 = arith.mulf %19, %23 : vector<16x16xf32>
    %cst_9 = arith.constant dense<0.000000e+00> : vector<16xf32>
    %25 = vector.multi_reduction <add>, %24, %cst_9 [0] : vector<16x16xf32> to vector<16xf32>
    %26 = vector.shape_cast %25 : vector<16xf32> to vector<1x16xf32>
    %cst_10 = arith.constant 1.600000e+01 : f32
    %27 = vector.broadcast %cst_10 : f32 to vector<1x16xf32>
    %28 = arith.divf %26, %27 : vector<1x16xf32>
    %cst_11 = arith.constant dense<0.000000e+00> : vector<1x8xf32>
    %29 = tpu.matmul %28, %13, %cst_11 {dimension_numbers = #tpu.dot_dimension_numbers<[1], [0], [0], [1], [0, 0, 1, 1], [], []>} : vector<1x16xf32>, vector<16x8xf32>, vector<1x8xf32> -> vector<1x8xf32>
    %c32 = arith.constant 32 : index
    %c0_12 = arith.constant 0 : index
    %30 = vector.load %arg1[%c32, %c0_12] : memref<160x128xf32, #tpu.memory_space<vmem>>, vector<8x32xf32>
    %cst_13 = arith.constant dense<0.000000e+00> : vector<1x32xf32>
    %31 = tpu.matmul %29, %30, %cst_13 {dimension_numbers = #tpu.dot_dimension_numbers<[1], [0], [0], [1], [0, 0, 1, 1], [], []>} : vector<1x8xf32>, vector<8x32xf32>, vector<1x32xf32> -> vector<1x32xf32>
    %32 = arith.addf %10, %31 : vector<1x32xf32>
    %33 = vector.extract_strided_slice %6 {offsets = [0, 8], sizes = [16, 8], strides = [1, 1]} : vector<16x32xf32> to vector<16x8xf32>
    %34 = vector.extract_strided_slice %8 {offsets = [8, 0], sizes = [8, 16], strides = [1, 1]} : vector<32x16xf32> to vector<8x16xf32>
    %35 = vector.extract_strided_slice %9 {offsets = [0, 8], sizes = [16, 8], strides = [1, 1]} : vector<16x32xf32> to vector<16x8xf32>
    %cst_14 = arith.constant dense<0.000000e+00> : vector<16x16xf32>
    %36 = tpu.matmul %33, %34, %cst_14 {dimension_numbers = #tpu.dot_dimension_numbers<[1], [0], [0], [1], [0, 0, 1, 1], [], []>} : vector<16x8xf32>, vector<8x16xf32>, vector<16x16xf32> -> vector<16x16xf32>
    %cst_15 = arith.constant dense<0xFF800000> : vector<16xf32>
    %37 = vector.multi_reduction <maximumf>, %36, %cst_15 [1] : vector<16x16xf32> to vector<16xf32>
    %38 = vector.shape_cast %37 : vector<16xf32> to vector<16x1xf32>
    %39 = vector.broadcast %38 : vector<16x1xf32> to vector<16x16xf32>
    %40 = arith.subf %36, %39 : vector<16x16xf32>
    %41 = math.exp %40 : vector<16x16xf32>
    %cst_16 = arith.constant dense<0.000000e+00> : vector<16xf32>
    %42 = vector.multi_reduction <add>, %41, %cst_16 [1] : vector<16x16xf32> to vector<16xf32>
    %43 = vector.shape_cast %42 : vector<16xf32> to vector<16x1xf32>
    %44 = tpu.reciprocal %43 {approx = true} : vector<16x1xf32> -> vector<16x1xf32>
    %45 = vector.broadcast %44 : vector<16x1xf32> to vector<16x16xf32>
    %46 = arith.mulf %41, %45 : vector<16x16xf32>
    %cst_17 = arith.constant dense<0.000000e+00> : vector<16xf32>
    %47 = vector.multi_reduction <add>, %46, %cst_17 [0] : vector<16x16xf32> to vector<16xf32>
    %48 = vector.shape_cast %47 : vector<16xf32> to vector<1x16xf32>
    %cst_18 = arith.constant 1.600000e+01 : f32
    %49 = vector.broadcast %cst_18 : f32 to vector<1x16xf32>
    %50 = arith.divf %48, %49 : vector<1x16xf32>
    %cst_19 = arith.constant dense<0.000000e+00> : vector<1x8xf32>
    %51 = tpu.matmul %50, %35, %cst_19 {dimension_numbers = #tpu.dot_dimension_numbers<[1], [0], [0], [1], [0, 0, 1, 1], [], []>} : vector<1x16xf32>, vector<16x8xf32>, vector<1x8xf32> -> vector<1x8xf32>
    %c40 = arith.constant 40 : index
    %c0_20 = arith.constant 0 : index
    %52 = vector.load %arg1[%c40, %c0_20] : memref<160x128xf32, #tpu.memory_space<vmem>>, vector<8x32xf32>
    %cst_21 = arith.constant dense<0.000000e+00> : vector<1x32xf32>
    %53 = tpu.matmul %51, %52, %cst_21 {dimension_numbers = #tpu.dot_dimension_numbers<[1], [0], [0], [1], [0, 0, 1, 1], [], []>} : vector<1x8xf32>, vector<8x32xf32>, vector<1x32xf32> -> vector<1x32xf32>
    %54 = arith.addf %32, %53 : vector<1x32xf32>
    %55 = vector.extract_strided_slice %6 {offsets = [0, 16], sizes = [16, 8], strides = [1, 1]} : vector<16x32xf32> to vector<16x8xf32>
    %56 = vector.extract_strided_slice %8 {offsets = [16, 0], sizes = [8, 16], strides = [1, 1]} : vector<32x16xf32> to vector<8x16xf32>
    %57 = vector.extract_strided_slice %9 {offsets = [0, 16], sizes = [16, 8], strides = [1, 1]} : vector<16x32xf32> to vector<16x8xf32>
    %cst_22 = arith.constant dense<0.000000e+00> : vector<16x16xf32>
    %58 = tpu.matmul %55, %56, %cst_22 {dimension_numbers = #tpu.dot_dimension_numbers<[1], [0], [0], [1], [0, 0, 1, 1], [], []>} : vector<16x8xf32>, vector<8x16xf32>, vector<16x16xf32> -> vector<16x16xf32>
    %cst_23 = arith.constant dense<0xFF800000> : vector<16xf32>
    %59 = vector.multi_reduction <maximumf>, %58, %cst_23 [1] : vector<16x16xf32> to vector<16xf32>
    %60 = vector.shape_cast %59 : vector<16xf32> to vector<16x1xf32>
    %61 = vector.broadcast %60 : vector<16x1xf32> to vector<16x16xf32>
    %62 = arith.subf %58, %61 : vector<16x16xf32>
    %63 = math.exp %62 : vector<16x16xf32>
    %cst_24 = arith.constant dense<0.000000e+00> : vector<16xf32>
    %64 = vector.multi_reduction <add>, %63, %cst_24 [1] : vector<16x16xf32> to vector<16xf32>
    %65 = vector.shape_cast %64 : vector<16xf32> to vector<16x1xf32>
    %66 = tpu.reciprocal %65 {approx = true} : vector<16x1xf32> -> vector<16x1xf32>
    %67 = vector.broadcast %66 : vector<16x1xf32> to vector<16x16xf32>
    %68 = arith.mulf %63, %67 : vector<16x16xf32>
    %cst_25 = arith.constant dense<0.000000e+00> : vector<16xf32>
    %69 = vector.multi_reduction <add>, %68, %cst_25 [0] : vector<16x16xf32> to vector<16xf32>
    %70 = vector.shape_cast %69 : vector<16xf32> to vector<1x16xf32>
    %cst_26 = arith.constant 1.600000e+01 : f32
    %71 = vector.broadcast %cst_26 : f32 to vector<1x16xf32>
    %72 = arith.divf %70, %71 : vector<1x16xf32>
    %cst_27 = arith.constant dense<0.000000e+00> : vector<1x8xf32>
    %73 = tpu.matmul %72, %57, %cst_27 {dimension_numbers = #tpu.dot_dimension_numbers<[1], [0], [0], [1], [0, 0, 1, 1], [], []>} : vector<1x16xf32>, vector<16x8xf32>, vector<1x8xf32> -> vector<1x8xf32>
    %c48 = arith.constant 48 : index
    %c0_28 = arith.constant 0 : index
    %74 = vector.load %arg1[%c48, %c0_28] : memref<160x128xf32, #tpu.memory_space<vmem>>, vector<8x32xf32>
    %cst_29 = arith.constant dense<0.000000e+00> : vector<1x32xf32>
    %75 = tpu.matmul %73, %74, %cst_29 {dimension_numbers = #tpu.dot_dimension_numbers<[1], [0], [0], [1], [0, 0, 1, 1], [], []>} : vector<1x8xf32>, vector<8x32xf32>, vector<1x32xf32> -> vector<1x32xf32>
    %76 = arith.addf %54, %75 : vector<1x32xf32>
    %77 = vector.extract_strided_slice %6 {offsets = [0, 24], sizes = [16, 8], strides = [1, 1]} : vector<16x32xf32> to vector<16x8xf32>
    %78 = vector.extract_strided_slice %8 {offsets = [24, 0], sizes = [8, 16], strides = [1, 1]} : vector<32x16xf32> to vector<8x16xf32>
    %79 = vector.extract_strided_slice %9 {offsets = [0, 24], sizes = [16, 8], strides = [1, 1]} : vector<16x32xf32> to vector<16x8xf32>
    %cst_30 = arith.constant dense<0.000000e+00> : vector<16x16xf32>
    %80 = tpu.matmul %77, %78, %cst_30 {dimension_numbers = #tpu.dot_dimension_numbers<[1], [0], [0], [1], [0, 0, 1, 1], [], []>} : vector<16x8xf32>, vector<8x16xf32>, vector<16x16xf32> -> vector<16x16xf32>
    %cst_31 = arith.constant dense<0xFF800000> : vector<16xf32>
    %81 = vector.multi_reduction <maximumf>, %80, %cst_31 [1] : vector<16x16xf32> to vector<16xf32>
    %82 = vector.shape_cast %81 : vector<16xf32> to vector<16x1xf32>
    %83 = vector.broadcast %82 : vector<16x1xf32> to vector<16x16xf32>
    %84 = arith.subf %80, %83 : vector<16x16xf32>
    %85 = math.exp %84 : vector<16x16xf32>
    %cst_32 = arith.constant dense<0.000000e+00> : vector<16xf32>
    %86 = vector.multi_reduction <add>, %85, %cst_32 [1] : vector<16x16xf32> to vector<16xf32>
    %87 = vector.shape_cast %86 : vector<16xf32> to vector<16x1xf32>
    %88 = tpu.reciprocal %87 {approx = true} : vector<16x1xf32> -> vector<16x1xf32>
    %89 = vector.broadcast %88 : vector<16x1xf32> to vector<16x16xf32>
    %90 = arith.mulf %85, %89 : vector<16x16xf32>
    %cst_33 = arith.constant dense<0.000000e+00> : vector<16xf32>
    %91 = vector.multi_reduction <add>, %90, %cst_33 [0] : vector<16x16xf32> to vector<16xf32>
    %92 = vector.shape_cast %91 : vector<16xf32> to vector<1x16xf32>
    %cst_34 = arith.constant 1.600000e+01 : f32
    %93 = vector.broadcast %cst_34 : f32 to vector<1x16xf32>
    %94 = arith.divf %92, %93 : vector<1x16xf32>
    %cst_35 = arith.constant dense<0.000000e+00> : vector<1x8xf32>
    %95 = tpu.matmul %94, %79, %cst_35 {dimension_numbers = #tpu.dot_dimension_numbers<[1], [0], [0], [1], [0, 0, 1, 1], [], []>} : vector<1x16xf32>, vector<16x8xf32>, vector<1x8xf32> -> vector<1x8xf32>
    %c56 = arith.constant 56 : index
    %c0_36 = arith.constant 0 : index
    %96 = vector.load %arg1[%c56, %c0_36] : memref<160x128xf32, #tpu.memory_space<vmem>>, vector<8x32xf32>
    %cst_37 = arith.constant dense<0.000000e+00> : vector<1x32xf32>
    %97 = tpu.matmul %95, %96, %cst_37 {dimension_numbers = #tpu.dot_dimension_numbers<[1], [0], [0], [1], [0, 0, 1, 1], [], []>} : vector<1x8xf32>, vector<8x32xf32>, vector<1x32xf32> -> vector<1x32xf32>
    %98 = arith.addf %76, %97 : vector<1x32xf32>
    %c64 = arith.constant 64 : index
    %c0_38 = arith.constant 0 : index
    %99 = vector.load %arg1[%c64, %c0_38] : memref<160x128xf32, #tpu.memory_space<vmem>>, vector<32x64xf32>
    %cst_39 = arith.constant dense<0.000000e+00> : vector<1x64xf32>
    %100 = tpu.matmul %98, %99, %cst_39 {dimension_numbers = #tpu.dot_dimension_numbers<[1], [0], [0], [1], [0, 0, 1, 1], [], []>} : vector<1x32xf32>, vector<32x64xf32>, vector<1x64xf32> -> vector<1x64xf32>
    %c2 = arith.constant 2 : index
    %c0_40 = arith.constant 0 : index
    %101 = vector.load %arg2[%c2, %c0_40] : memref<4x128xf32, #tpu.memory_space<vmem>>, vector<1x64xf32>
    %102 = arith.addf %100, %101 : vector<1x64xf32>
    %cst_41 = arith.constant 5.000000e-01 : f32
    %103 = vector.broadcast %cst_41 : f32 to vector<1x64xf32>
    %104 = arith.mulf %103, %102 : vector<1x64xf32>
    %cst_42 = arith.constant 4.471500e-02 : f32
    %105 = vector.broadcast %cst_42 : f32 to vector<1x64xf32>
    %106 = arith.mulf %105, %102 : vector<1x64xf32>
    %107 = arith.mulf %106, %102 : vector<1x64xf32>
    %108 = arith.mulf %107, %102 : vector<1x64xf32>
    %109 = arith.addf %102, %108 : vector<1x64xf32>
    %cst_43 = arith.constant 0.797884583 : f32
    %110 = vector.broadcast %cst_43 : f32 to vector<1x64xf32>
    %111 = arith.mulf %110, %109 : vector<1x64xf32>
    %112 = math.tanh %111 : vector<1x64xf32>
    %cst_44 = arith.constant 1.000000e+00 : f32
    %113 = vector.broadcast %cst_44 : f32 to vector<1x64xf32>
    %114 = arith.addf %113, %112 : vector<1x64xf32>
    %115 = arith.mulf %104, %114 : vector<1x64xf32>
    %c96 = arith.constant 96 : index
    %c0_45 = arith.constant 0 : index
    %116 = vector.load %arg1[%c96, %c0_45] : memref<160x128xf32, #tpu.memory_space<vmem>>, vector<64x128xf32>
    %cst_46 = arith.constant dense<0.000000e+00> : vector<1x128xf32>
    %117 = tpu.matmul %115, %116, %cst_46 {dimension_numbers = #tpu.dot_dimension_numbers<[1], [0], [0], [1], [0, 0, 1, 1], [], []>} : vector<1x64xf32>, vector<64x128xf32>, vector<1x128xf32> -> vector<1x128xf32>
    %c3 = arith.constant 3 : index
    %c0_47 = arith.constant 0 : index
    %118 = vector.load %arg2[%c3, %c0_47] : memref<4x128xf32, #tpu.memory_space<vmem>>, vector<1x128xf32>
    %119 = arith.addf %117, %118 : vector<1x128xf32>
    %cst_48 = arith.constant dense<0xFF800000> : vector<1xf32>
    %120 = vector.multi_reduction <maximumf>, %119, %cst_48 [1] : vector<1x128xf32> to vector<1xf32>
    %121 = vector.shape_cast %120 : vector<1xf32> to vector<1x1xf32>
    %122 = vector.broadcast %121 : vector<1x1xf32> to vector<1x128xf32>
    %123 = arith.subf %119, %122 : vector<1x128xf32>
    %124 = math.exp %123 : vector<1x128xf32>
    %cst_49 = arith.constant dense<0.000000e+00> : vector<1xf32>
    %125 = vector.multi_reduction <add>, %124, %cst_49 [1] : vector<1x128xf32> to vector<1xf32>
    %126 = vector.shape_cast %125 : vector<1xf32> to vector<1x1xf32>
    %127 = tpu.reciprocal %126 {approx = true} : vector<1x1xf32> -> vector<1x1xf32>
    %128 = vector.broadcast %127 : vector<1x1xf32> to vector<1x128xf32>
    %129 = arith.mulf %124, %128 : vector<1x128xf32>
    %c0_50 = arith.constant 0 : index
    %c0_51 = arith.constant 0 : index
    %130 = vector.load %arg3[%c0_50, %c0_51] : memref<1x128xf32, #tpu.memory_space<vmem>>, vector<1x128xf32>
    tpu.vector_store %arg3[%c0_50, %c0_51], %129 {strides = array<i32>} : memref<1x128xf32, #tpu.memory_space<vmem>>, vector<1x128xf32>,
    return
  }
}

</mosaic_0001>

<llo_original>
// kernel: tpu_custom_call.1
$region0: #{tpu_custom_call.1}
  #allocation0 [shape = 'u32[]', space=smem, size = 0x4, offset = 0x4, fixed_abs, tag = 'smem constant byte address 0x4 - core index']
  #allocation1 [shape = 'u32[144,128]{1,0:T(1,128)}', space=vmem, size = 0x12000, scoped, tag = 'internal scratch']
  %s0 = inlined_call_operand.hbm [shape: f32[16,32], index: 0, kind: input, shape index: {}]
  %s1 = inlined_call_operand.hbm [shape: f32[160,128], index: 1, kind: input, shape index: {}]
  %s2 = inlined_call_operand.vmem [shape: f32[4,128], index: 2, kind: input, shape index: {}]
  %s3 = inlined_call_operand.hbm [shape: f32[1,128], index: 3, kind: output, shape index: {}]
  %s4 = sld [smem:[#allocation0]]
  $region30: #{tpu_custom_call.1} parent=0
    _
  %s6 = ssub.s32 1, %s4
  %s7 = scalar_select 0, %s6, %s4
  $region1: #{tpu_custom_call.1} parent=0
    #allocation2 [shape = 'u8[8192]{0}', space=vmem, size = 0x2000, scoped, tag = 'input window, operand 0, single buffered']
    #allocation3 [shape = 's32[1]{0}', space=sflag, size = 0x4, scoped, tag = 'scoped memory for tpu_custom_call.1']
    #allocation4 [shape = 's32[1]{0}', space=sflag, size = 0x4, scoped, tag = 'scoped memory for tpu_custom_call.1']
    #allocation5 [shape = 'u8[81920]{0}', space=vmem, size = 0x14000, scoped, tag = 'input window, operand 1, single buffered']
    #allocation6 [shape = 's32[1]{0}', space=sflag, size = 0x4, scoped, tag = 'scoped memory for tpu_custom_call.1']
    #allocation7 [shape = 'u8[512]{0}', space=vmem, size = 0x400, scoped, tag = 'output window, operand 0, single buffered']
    %8 = vsyncpa [#allocation3], 0
    %9 = vsyncpa [#allocation6], 0
    %10 = vsyncpa [#allocation4], 0
    // Predicated region
    $region2: #{tpu_custom_call.1} parent=1 // pred_check
      _
    $region3: #{tpu_custom_call.1} parent=1 // pred_check_branch
      %12 = sbr.rel (0) target = $region5
    $region4: #{tpu_custom_call.1} parent=1 // pred_region
      %s14 = ssub.s32 256, 256
      %15 = vsyncadd [#allocation3], %s14
      %s16 = sshll.u32 [#allocation2], 4
      %s17 = int_to_ptr.vmem [resolvable:$true] %s16
      %22 = dma.hbm_to_vmem [thread:$0]  %s0, 256, %s17, [#allocation3], 128, 128, 8
    $region5: #{tpu_custom_call.1} parent=1 // pred_fallthru
      _
    // Predicated region
    $region6: #{tpu_custom_call.1} parent=1 // pred_check
      _
    $region7: #{tpu_custom_call.1} parent=1 // pred_check_branch
      %24 = sbr.rel (0) target = $region9
    $region8: #{tpu_custom_call.1} parent=1 // pred_region
      %s26 = ssub.s32 2560, 2560
      %27 = vsyncadd [#allocation6], %s26
      %s28 = sshll.u32 [#allocation5], 4
      %s29 = int_to_ptr.vmem [resolvable:$true] %s28
      %34 = dma.hbm_to_vmem [thread:$0]  %s1, 2560, %s29, [#allocation6], 128, 128, 8
    $region9: #{tpu_custom_call.1} parent=1 // pred_fallthru
      _
    // Predicated region
    $region10: #{tpu_custom_call.1} parent=1 // pred_check
      _
    $region11: #{tpu_custom_call.1} parent=1 // pred_check_branch
      %36 = sbr.rel (0) target = $region13
    $region12: #{tpu_custom_call.1} parent=1 // pred_region
      _
    $region13: #{tpu_custom_call.1} parent=1 // pred_fallthru
      _
    // Predicated region
    $region14: #{tpu_custom_call.1} parent=1 // pred_check
      _
    $region15: #{tpu_custom_call.1} parent=1 // pred_check_branch
      %38 = sbr.rel (0) target = $region17
    $region16: #{tpu_custom_call.1} parent=1 // pred_region
      %39 = dma.done [#allocation3], 256
    $region17: #{tpu_custom_call.1} parent=1 // pred_fallthru
      _
    // Predicated region
    $region18: #{tpu_custom_call.1} parent=1 // pred_check
      _
    $region19: #{tpu_custom_call.1} parent=1 // pred_check_branch
      %41 = sbr.rel (0) target = $region21
    $region20: #{tpu_custom_call.1} parent=1 // pred_region
      %42 = dma.done [#allocation6], 2560
    $region21: #{tpu_custom_call.1} parent=1 // pred_fallthru
      _
    %v43 = vld [vmem:[#allocation2] sm:$0xff]
    %v44 = vld [vmem:[#allocation2 + $0x8] sm:$0xff]
    %v45 = vld [vmem:[#allocation5] sm:$0xff]
    %v46 = vld [vmem:[#allocation5 + $0x8] sm:$0xff]
    %v47 = vld [vmem:[#allocation5 + $0x10] sm:$0xff]
    %v48 = vld [vmem:[#allocation5 + $0x18] sm:$0xff]
    %v49 = vld [vmem:[%s2] sm:$0x1]
    %v50 = vlaneseq
    %v51 = vshrl.u32 %v50, 7
    %v52 = vsub.s32 0, %v51
    %v53 = vrot.slane %v49, %v52
    %vm54 = vcmask 261120
    %v56 = vsel %vm54, %v43, 0
    %v59 = vsel %vm54, %v44, 0
    %61 = vmatprep.subr.mxu0 0.0
    %62 = vmatpush1.msra.mxu0 %v45
    %63 = vmatprep.subr.mxu0 0.0
    %64 = vmatpush1.msra.mxu0 %v46
    %65 = vmatprep.subr.mxu0 0.0
    %66 = vmatpush1.msra.mxu0 %v47
    %67 = vmatprep.subr.mxu0 0.0
    %68 = vmatpush1.msra.mxu0 %v48
    %69 = vmatprep.subr.mxu0 0.0
    %70 = vmatpush1.msra.mxu0 0.0
    %71 = vmatprep.subr.mxu0 0.0
    %72 = vmatpush1.msra.mxu0 0.0
    %73 = vmatprep.subr.mxu0 0.0
    %74 = vmatpush1.msra.mxu0 0.0
    %75 = vmatprep.subr.mxu0 0.0
    %76 = vmatpush1.msra.mxu0 0.0
    %77 = vmatprep.subr.mxu0 0.0
    %78 = vmatpush1.msra.mxu0 0.0
    %79 = vmatprep.subr.mxu0 0.0
    %80 = vmatpush1.msra.mxu0 0.0
    %81 = vmatprep.subr.mxu0 0.0
    %82 = vmatpush1.msra.mxu0 0.0
    %83 = vmatprep.subr.mxu0 0.0
    %84 = vmatpush1.msra.mxu0 0.0
    %85 = vmatprep.subr.mxu0 0.0
    %86 = vmatpush1.msra.mxu0 0.0
    %87 = vmatprep.subr.mxu0 0.0
    %88 = vmatpush1.msra.mxu0 0.0
    %89 = vmatprep.subr.mxu0 0.0
    %90 = vmatpush1.msra.mxu0 0.0
    %91 = vmatprep.subr.mxu0 0.0
    %92 = vmatpush1.msra.mxu0 0.0
    %93 = vmatprep.subr.mxu0 0.0
    %94 = vmatpush1.msra.mxu0 0.0
    %95 = vmatprep.subr.mxu0 0.0
    %96 = vmatpush1.msra.mxu0 0.0
    %97 = vmatprep.subr.mxu0 0.0
    %98 = vmatpush1.msra.mxu0 0.0
    %99 = vmatprep.subr.mxu0 0.0
    %100 = vmatpush1.msra.mxu0 0.0
    %101 = vmatprep.subr.mxu0 0.0
    %102 = vmatpush1.msra.mxu0 0.0
    %103 = vmatprep.subr.mxu0 0.0
    %104 = vmatpush1.msra.mxu0 0.0
    %105 = vmatprep.subr.mxu0 0.0
    %106 = vmatpush1.msra.mxu0 0.0
    %107 = vmatprep.subr.mxu0 0.0
    %108 = vmatpush1.msra.mxu0 0.0
    %109 = vmatprep.subr.mxu0 0.0
    %110 = vmatpush1.msra.mxu0 0.0
    %111 = vmatprep.subr.mxu0 0.0
    %112 = vmatpush1.msra.mxu0 0.0
    %113 = vmatprep.subr.mxu0 0.0
    %114 = vmatpush1.msra.mxu0 0.0
    %115 = vmatprep.subr.mxu0 0.0
    %116 = vmatpush1.msra.mxu0 0.0
    %117 = vmatprep.subr.mxu0 0.0
    %118 = vmatpush1.msra.mxu0 0.0
    %119 = vmatprep.subr.mxu0 0.0
    %120 = vmatpush1.msra.mxu0 0.0
    %121 = vmatprep.subr.mxu0 0.0
    %122 = vmatpush1.msra.mxu0 0.0
    %123 = vmatprep.subr.mxu0 0.0
    %124 = vmatpush1.msra.mxu0 0.0
    %125 = vmatprep.mubr.f32.mxu0 0.0
    %126 = vmatmul.mubr.f32.gmra.mrb[0].mxu0 %v56
    %v127 = vpop.f32.mrb[0].mxu0
    %v128 = vadd.f32 %v53, %v127
    %v129 = vpop.f32.mrb[0].mxu0
    %130 = vmatprep.mubr.f32.mxu0 0.0
    %131 = vmatmul.mubr.f32.gmra.mrb[0].mxu0 %v59
    %v132 = vpop.f32.mrb[0].mxu0
    %v133 = vadd.f32 %v53, %v132
    %v134 = vpop.f32.mrb[0].mxu0
    %135 = vdwg.mxu0
    %v136 = vld [vmem:[%s2 + $0x1] sm:$0x1]
    %139 = vrot.lane.b32.xlu0 %v128, 96
    %v140 = vpop.permute.xlu0 %139
    %141 = vrot.lane.b32.xlu0 %v133, 96
    %v142 = vpop.permute.xlu0 %141
    %vm143 = vcmask 64512
    %v144 = vsel %vm143, %v128, 0
    %v146 = vsel %vm143, %v133, 0
    %v148 = vsel %vm143, %v140, 0
    %v150 = vsel %vm143, %v142, 0
    %152 = vmatprep.subr.mxu0 0.0
    %153 = vmatpush1.xpose.msra.mxu0 %v148
    %154 = vmatprep.subr.mxu0 0.0
    %155 = vmatpush1.xpose.msra.mxu0 %v150
    %156 = vmatprep.subr.mxu0 0.0
    %157 = vmatpush1.xpose.msra.mxu0 0.0
    %158 = vmatprep.subr.mxu0 0.0
    %159 = vmatpush1.xpose.msra.mxu0 0.0
    %160 = vmatprep.subr.mxu0 0.0
    %161 = vmatpush1.xpose.msra.mxu0 0.0
    %162 = vmatprep.subr.mxu0 0.0
    %163 = vmatpush1.xpose.msra.mxu0 0.0
    %164 = vmatprep.subr.mxu0 0.0
    %165 = vmatpush1.xpose.msra.mxu0 0.0
    %166 = vmatprep.subr.mxu0 0.0
    %167 = vmatpush1.xpose.msra.mxu0 0.0
    %168 = vmatprep.subr.mxu0 0.0
    %169 = vmatpush1.xpose.msra.mxu0 0.0
    %170 = vmatprep.subr.mxu0 0.0
    %171 = vmatpush1.xpose.msra.mxu0 0.0
    %172 = vmatprep.subr.mxu0 0.0
    %173 = vmatpush1.xpose.msra.mxu0 0.0
    %174 = vmatprep.subr.mxu0 0.0
    %175 = vmatpush1.xpose.msra.mxu0 0.0
    %176 = vmatprep.subr.mxu0 0.0
    %177 = vmatpush1.xpose.msra.mxu0 0.0
    %178 = vmatprep.subr.mxu0 0.0
    %179 = vmatpush1.xpose.msra.mxu0 0.0
    %180 = vmatprep.subr.mxu0 0.0
    %181 = vmatpush1.xpose.msra.mxu0 0.0
    %182 = vmatprep.subr.mxu0 0.0
    %183 = vmatpush1.xpose.msra.mxu0 0.0
    %184 = vmatprep.subr.mxu0 0.0
    %185 = vmatpush1.xpose.msra.mxu0 0.0
    %186 = vmatprep.subr.mxu0 0.0
    %187 = vmatpush1.xpose.msra.mxu0 0.0
    %188 = vmatprep.subr.mxu0 0.0
    %189 = vmatpush1.xpose.msra.mxu0 0.0
    %190 = vmatprep.subr.mxu0 0.0
    %191 = vmatpush1.xpose.msra.mxu0 0.0
    %192 = vmatprep.subr.mxu0 0.0
    %193 = vmatpush1.xpose.msra.mxu0 0.0
    %194 = vmatprep.subr.mxu0 0.0
    %195 = vmatpush1.xpose.msra.mxu0 0.0
    %196 = vmatprep.subr.mxu0 0.0
    %197 = vmatpush1.xpose.msra.mxu0 0.0
    %198 = vmatprep.subr.mxu0 0.0
    %199 = vmatpush1.xpose.msra.mxu0 0.0
    %200 = vmatprep.subr.mxu0 0.0
    %201 = vmatpush1.xpose.msra.mxu0 0.0
    %202 = vmatprep.subr.mxu0 0.0
    %203 = vmatpush1.xpose.msra.mxu0 0.0
    %204 = vmatprep.subr.mxu0 0.0
    %205 = vmatpush1.xpose.msra.mxu0 0.0
    %206 = vmatprep.subr.mxu0 0.0
    %207 = vmatpush1.xpose.msra.mxu0 0.0
    %208 = vmatprep.subr.mxu0 0.0
    %209 = vmatpush1.xpose.msra.mxu0 0.0
    %210 = vmatprep.subr.mxu0 0.0
    %211 = vmatpush1.xpose.msra.mxu0 0.0
    %212 = vmatprep.subr.mxu0 0.0
    %213 = vmatpush1.xpose.msra.mxu0 0.0
    %214 = vmatprep.subr.mxu0 0.0
    %215 = vmatpush1.xpose.msra.mxu0 0.0
    %216 = vmatprep.mubr.f32.mxu0 0.0
    %217 = vmatmul.mubr.f32.gmra.mrb[0].mxu0 %v144
    %v218 = vpop.f32.mrb[0].mxu0
    %v219 = vadd.f32 0.0, %v218
    %v220 = vpop.f32.mrb[0].mxu0
    %221 = vmatprep.mubr.f32.mxu0 0.0
    %222 = vmatmul.mubr.f32.gmra.mrb[0].mxu0 %v146
    %v223 = vpop.f32.mrb[0].mxu0
    %v224 = vadd.f32 0.0, %v223
    %v225 = vpop.f32.mrb[0].mxu0
    %226 = vdwg.mxu0
    %vm227 = vcmask 130048
    %v228 = vsel %vm227, %v219, -inf
    %229 = vmax.xlane.f32.xlu0 %v228
    %v230 = vpop.xlane.xlu0 %229
    %v231 = vsel %vm227, %v224, -inf
    %232 = vmax.xlane.f32.xlu0 %v231
    %v233 = vpop.xlane.xlu0 %232
    %v234 = vsub.f32 %v219, %v230
    %v235 = vsub.f32 %v224, %v233
    %v236 = vmul.f32 %v234, 1.442695
    %v237 = vpow.pop %v236
    %v238 = vmul.f32 %v235, 1.442695
    %v239 = vpow.pop %v238
    %v240 = vsel %vm227, %v237, 0.0
    %241 = vadd.xlane.f32.xlu0 %v240
    %v242 = vpop.xlane.xlu0 %241
    %v243 = vsel %vm227, %v239, 0.0
    %244 = vadd.xlane.f32.xlu0 %v243
    %v245 = vpop.xlane.xlu0 %244
    %v246 = vrcp.pop %v242
    %v247 = vrcp.pop %v245
    %v248 = vmul.f32 %v237, %v246
    %v249 = vmul.f32 %v239, %v247
    %v250 = vsel %vm227, %v248, 0.0
    %v251 = vsel %vm227, %v249, 0.0
    %v252 = vadd.f32 %v250, %v251
    %v253 = vrot.slane %v252, 4
    %v254 = vadd.f32 %v252, %v253
    %v255 = vrot.slane %v254, 2
    %v256 = vadd.f32 %v254, %v255
    %v257 = vrot.slane %v256, 1
    %v258 = vadd.f32 %v256, %v257
    %v259 = vrcp.pop 16.0
    %v260 = vmul.f32 %v258, %v259
    %261 = vrot.lane.b32.xlu0 %v128, 64
    %v262 = vpop.permute.xlu0 %261
    %263 = vrot.lane.b32.xlu0 %v133, 64
    %v264 = vpop.permute.xlu0 %263
    %v268 = vsel %vm227, %v260, 0
    %270 = vmatprep.subr.mxu0 0.0
    %271 = vmatpush1.msra.mxu0 %v262
    %272 = vmatprep.subr.mxu0 0.0
    %273 = vmatpush1.msra.mxu0 %v264
    %274 = vmatprep.subr.mxu0 0.0
    %275 = vmatpush1.msra.mxu0 0.0
    %276 = vmatprep.subr.mxu0 0.0
    %277 = vmatpush1.msra.mxu0 0.0
    %278 = vmatprep.subr.mxu0 0.0
    %279 = vmatpush1.msra.mxu0 0.0
    %280 = vmatprep.subr.mxu0 0.0
    %281 = vmatpush1.msra.mxu0 0.0
    %282 = vmatprep.subr.mxu0 0.0
    %283 = vmatpush1.msra.mxu0 0.0
    %284 = vmatprep.subr.mxu0 0.0
    %285 = vmatpush1.msra.mxu0 0.0
    %286 = vmatprep.subr.mxu0 0.0
    %287 = vmatpush1.msra.mxu0 0.0
    %288 = vmatprep.subr.mxu0 0.0
    %289 = vmatpush1.msra.mxu0 0.0
    %290 = vmatprep.subr.mxu0 0.0
    %291 = vmatpush1.msra.mxu0 0.0
    %292 = vmatprep.subr.mxu0 0.0
    %293 = vmatpush1.msra.mxu0 0.0
    %294 = vmatprep.subr.mxu0 0.0
    %295 = vmatpush1.msra.mxu0 0.0
    %296 = vmatprep.subr.mxu0 0.0
    %297 = vmatpush1.msra.mxu0 0.0
    %298 = vmatprep.subr.mxu0 0.0
    %299 = vmatpush1.msra.mxu0 0.0
    %300 = vmatprep.subr.mxu0 0.0
    %301 = vmatpush1.msra.mxu0 0.0
    %302 = vmatprep.subr.mxu0 0.0
    %303 = vmatpush1.msra.mxu0 0.0
    %304 = vmatprep.subr.mxu0 0.0
    %305 = vmatpush1.msra.mxu0 0.0
    %306 = vmatprep.subr.mxu0 0.0
    %307 = vmatpush1.msra.mxu0 0.0
    %308 = vmatprep.subr.mxu0 0.0
    %309 = vmatpush1.msra.mxu0 0.0
    %310 = vmatprep.subr.mxu0 0.0
    %311 = vmatpush1.msra.mxu0 0.0
    %312 = vmatprep.subr.mxu0 0.0
    %313 = vmatpush1.msra.mxu0 0.0
    %314 = vmatprep.subr.mxu0 0.0
    %315 = vmatpush1.msra.mxu0 0.0
    %316 = vmatprep.subr.mxu0 0.0
    %317 = vmatpush1.msra.mxu0 0.0
    %318 = vmatprep.subr.mxu0 0.0
    %319 = vmatpush1.msra.mxu0 0.0
    %320 = vmatprep.subr.mxu0 0.0
    %321 = vmatpush1.msra.mxu0 0.0
    %322 = vmatprep.subr.mxu0 0.0
    %323 = vmatpush1.msra.mxu0 0.0
    %324 = vmatprep.subr.mxu0 0.0
    %325 = vmatpush1.msra.mxu0 0.0
    %326 = vmatprep.subr.mxu0 0.0
    %327 = vmatpush1.msra.mxu0 0.0
    %328 = vmatprep.subr.mxu0 0.0
    %329 = vmatpush1.msra.mxu0 0.0
    %330 = vmatprep.subr.mxu0 0.0
    %331 = vmatpush1.msra.mxu0 0.0
    %332 = vmatprep.subr.mxu0 0.0
    %333 = vmatpush1.msra.mxu0 0.0
    %334 = vmatprep.mubr.f32.mxu0 0.0
    %335 = vmatmul.mubr.f32.gmra.mrb[0].mxu0 %v268
    %v336 = vpop.f32.mrb[0].mxu0
    %v337 = vadd.f32 0.0, %v336
    %v338 = vpop.f32.mrb[0].mxu0
    %339 = vdwg.mxu0
    %v340 = vld [vmem:[#allocation5 + $0x20] sm:$0xff]
    %v342 = vsel %vm143, %v337, 0
    %344 = vmatprep.subr.mxu0 0.0
    %345 = vmatpush1.msra.mxu0 %v340
    %346 = vmatprep.subr.mxu0 0.0
    %347 = vmatpush1.msra.mxu0 0.0
    %348 = vmatprep.subr.mxu0 0.0
    %349 = vmatpush1.msra.mxu0 0.0
    %350 = vmatprep.subr.mxu0 0.0
    %351 = vmatpush1.msra.mxu0 0.0
    %352 = vmatprep.subr.mxu0 0.0
    %353 = vmatpush1.msra.mxu0 0.0
    %354 = vmatprep.subr.mxu0 0.0
    %355 = vmatpush1.msra.mxu0 0.0
    %356 = vmatprep.subr.mxu0 0.0
    %357 = vmatpush1.msra.mxu0 0.0
    %358 = vmatprep.subr.mxu0 0.0
    %359 = vmatpush1.msra.mxu0 0.0
    %360 = vmatprep.subr.mxu0 0.0
    %361 = vmatpush1.msra.mxu0 0.0
    %362 = vmatprep.subr.mxu0 0.0
    %363 = vmatpush1.msra.mxu0 0.0
    %364 = vmatprep.subr.mxu0 0.0
    %365 = vmatpush1.msra.mxu0 0.0
    %366 = vmatprep.subr.mxu0 0.0
    %367 = vmatpush1.msra.mxu0 0.0
    %368 = vmatprep.subr.mxu0 0.0
    %369 = vmatpush1.msra.mxu0 0.0
    %370 = vmatprep.subr.mxu0 0.0
    %371 = vmatpush1.msra.mxu0 0.0
    %372 = vmatprep.subr.mxu0 0.0
    %373 = vmatpush1.msra.mxu0 0.0
    %374 = vmatprep.subr.mxu0 0.0
    %375 = vmatpush1.msra.mxu0 0.0
    %376 = vmatprep.subr.mxu0 0.0
    %377 = vmatpush1.msra.mxu0 0.0
    %378 = vmatprep.subr.mxu0 0.0
    %379 = vmatpush1.msra.mxu0 0.0
    %380 = vmatprep.subr.mxu0 0.0
    %381 = vmatpush1.msra.mxu0 0.0
    %382 = vmatprep.subr.mxu0 0.0
    %383 = vmatpush1.msra.mxu0 0.0
    %384 = vmatprep.subr.mxu0 0.0
    %385 = vmatpush1.msra.mxu0 0.0
    %386 = vmatprep.subr.mxu0 0.0
    %387 = vmatpush1.msra.mxu0 0.0
    %388 = vmatprep.subr.mxu0 0.0
    %389 = vmatpush1.msra.mxu0 0.0
    %390 = vmatprep.subr.mxu0 0.0
    %391 = vmatpush1.msra.mxu0 0.0
    %392 = vmatprep.subr.mxu0 0.0
    %393 = vmatpush1.msra.mxu0 0.0
    %394 = vmatprep.subr.mxu0 0.0
    %395 = vmatpush1.msra.mxu0 0.0
    %396 = vmatprep.subr.mxu0 0.0
    %397 = vmatpush1.msra.mxu0 0.0
    %398 = vmatprep.subr.mxu0 0.0
    %399 = vmatpush1.msra.mxu0 0.0
    %400 = vmatprep.subr.mxu0 0.0
    %401 = vmatpush1.msra.mxu0 0.0
    %402 = vmatprep.subr.mxu0 0.0
    %403 = vmatpush1.msra.mxu0 0.0
    %404 = vmatprep.subr.mxu0 0.0
    %405 = vmatpush1.msra.mxu0 0.0
    %406 = vmatprep.subr.mxu0 0.0
    %407 = vmatpush1.msra.mxu0 0.0
    %408 = vmatprep.mubr.f32.mxu0 0.0
    %409 = vmatmul.mubr.f32.gmra.mrb[0].mxu0 %v342
    %v410 = vpop.f32.mrb[0].mxu0
    %v411 = vadd.f32 0.0, %v410
    %v412 = vpop.f32.mrb[0].mxu0
    %413 = vdwg.mxu0
    %v414 = vadd.f32 %v136, %v411
    %415 = vrot.lane.b32.xlu0 %v128, 120
    %v416 = vpop.permute.xlu0 %415
    %417 = vrot.lane.b32.xlu0 %v133, 120
    %v418 = vpop.permute.xlu0 %417
    %419 = vrot.lane.b32.xlu0 %v128, 88
    %v420 = vpop.permute.xlu0 %419
    %421 = vrot.lane.b32.xlu0 %v133, 88
    %v422 = vpop.permute.xlu0 %421
    %v423 = vsel %vm143, %v416, 0
    %v425 = vsel %vm143, %v418, 0
    %v427 = vsel %vm143, %v420, 0
    %v429 = vsel %vm143, %v422, 0
    %431 = vmatprep.subr.mxu0 0.0
    %432 = vmatpush1.xpose.msra.mxu0 %v427
    %433 = vmatprep.subr.mxu0 0.0
    %434 = vmatpush1.xpose.msra.mxu0 %v429
    %435 = vmatprep.subr.mxu0 0.0
    %436 = vmatpush1.xpose.msra.mxu0 0.0
    %437 = vmatprep.subr.mxu0 0.0
    %438 = vmatpush1.xpose.msra.mxu0 0.0
    %439 = vmatprep.subr.mxu0 0.0
    %440 = vmatpush1.xpose.msra.mxu0 0.0
    %441 = vmatprep.subr.mxu0 0.0
    %442 = vmatpush1.xpose.msra.mxu0 0.0
    %443 = vmatprep.subr.mxu0 0.0
    %444 = vmatpush1.xpose.msra.mxu0 0.0
    %445 = vmatprep.subr.mxu0 0.0
    %446 = vmatpush1.xpose.msra.mxu0 0.0
    %447 = vmatprep.subr.mxu0 0.0
    %448 = vmatpush1.xpose.msra.mxu0 0.0
    %449 = vmatprep.subr.mxu0 0.0
    %450 = vmatpush1.xpose.msra.mxu0 0.0
    %451 = vmatprep.subr.mxu0 0.0
    %452 = vmatpush1.xpose.msra.mxu0 0.0
    %453 = vmatprep.subr.mxu0 0.0
    %454 = vmatpush1.xpose.msra.mxu0 0.0
    %455 = vmatprep.subr.mxu0 0.0
    %456 = vmatpush1.xpose.msra.mxu0 0.0
    %457 = vmatprep.subr.mxu0 0.0
    %458 = vmatpush1.xpose.msra.mxu0 0.0
    %459 = vmatprep.subr.mxu0 0.0
    %460 = vmatpush1.xpose.msra.mxu0 0.0
    %461 = vmatprep.subr.mxu0 0.0
    %462 = vmatpush1.xpose.msra.mxu0 0.0
    %463 = vmatprep.subr.mxu0 0.0
    %464 = vmatpush1.xpose.msra.mxu0 0.0
    %465 = vmatprep.subr.mxu0 0.0
    %466 = vmatpush1.xpose.msra.mxu0 0.0
    %467 = vmatprep.subr.mxu0 0.0
    %468 = vmatpush1.xpose.msra.mxu0 0.0
    %469 = vmatprep.subr.mxu0 0.0
    %470 = vmatpush1.xpose.msra.mxu0 0.0
    %471 = vmatprep.subr.mxu0 0.0
    %472 = vmatpush1.xpose.msra.mxu0 0.0
    %473 = vmatprep.subr.mxu0 0.0
    %474 = vmatpush1.xpose.msra.mxu0 0.0
    %475 = vmatprep.subr.mxu0 0.0
    %476 = vmatpush1.xpose.msra.mxu0 0.0
    %477 = vmatprep.subr.mxu0 0.0
    %478 = vmatpush1.xpose.msra.mxu0 0.0
    %479 = vmatprep.subr.mxu0 0.0
    %480 = vmatpush1.xpose.msra.mxu0 0.0
    %481 = vmatprep.subr.mxu0 0.0
    %482 = vmatpush1.xpose.msra.mxu0 0.0
    %483 = vmatprep.subr.mxu0 0.0
    %484 = vmatpush1.xpose.msra.mxu0 0.0
    %485 = vmatprep.subr.mxu0 0.0
    %486 = vmatpush1.xpose.msra.mxu0 0.0
    %487 = vmatprep.subr.mxu0 0.0
    %488 = vmatpush1.xpose.msra.mxu0 0.0
    %489 = vmatprep.subr.mxu0 0.0
    %490 = vmatpush1.xpose.msra.mxu0 0.0
    %491 = vmatprep.subr.mxu0 0.0
    %492 = vmatpush1.xpose.msra.mxu0 0.0
    %493 = vmatprep.subr.mxu0 0.0
    %494 = vmatpush1.xpose.msra.mxu0 0.0
    %495 = vmatprep.mubr.f32.mxu0 0.0
    %496 = vmatmul.mubr.f32.gmra.mrb[0].mxu0 %v423
    %v497 = vpop.f32.mrb[0].mxu0
    %v498 = vadd.f32 0.0, %v497
    %v499 = vpop.f32.mrb[0].mxu0
    %500 = vmatprep.mubr.f32.mxu0 0.0
    %501 = vmatmul.mubr.f32.gmra.mrb[0].mxu0 %v425
    %v502 = vpop.f32.mrb[0].mxu0
    %v503 = vadd.f32 0.0, %v502
    %v504 = vpop.f32.mrb[0].mxu0
    %505 = vdwg.mxu0
    %v506 = vsel %vm227, %v498, -inf
    %507 = vmax.xlane.f32.xlu0 %v506
    %v508 = vpop.xlane.xlu0 %507
    %v509 = vsel %vm227, %v503, -inf
    %510 = vmax.xlane.f32.xlu0 %v509
    %v511 = vpop.xlane.xlu0 %510
    %v512 = vsub.f32 %v498, %v508
    %v513 = vsub.f32 %v503, %v511
    %v514 = vmul.f32 %v512, 1.442695
    %v515 = vpow.pop %v514
    %v516 = vmul.f32 %v513, 1.442695
    %v517 = vpow.pop %v516
    %v518 = vsel %vm227, %v515, 0.0
    %519 = vadd.xlane.f32.xlu0 %v518
    %v520 = vpop.xlane.xlu0 %519
    %v521 = vsel %vm227, %v517, 0.0
    %522 = vadd.xlane.f32.xlu0 %v521
    %v523 = vpop.xlane.xlu0 %522
    %v524 = vrcp.pop %v520
    %v525 = vrcp.pop %v523
    %v526 = vmul.f32 %v515, %v524
    %v527 = vmul.f32 %v517, %v525
    %v528 = vsel %vm227, %v526, 0.0
    %v529 = vsel %vm227, %v527, 0.0
    %v530 = vadd.f32 %v528, %v529
    %v531 = vrot.slane %v530, 4
    %v532 = vadd.f32 %v530, %v531
    %v533 = vrot.slane %v532, 2
    %v534 = vadd.f32 %v532, %v533
    %v535 = vrot.slane %v534, 1
    %v536 = vadd.f32 %v534, %v535
    %v537 = vmul.f32 %v536, %v259
    %538 = vrot.lane.b32.xlu0 %v128, 56
    %v539 = vpop.permute.xlu0 %538
    %540 = vrot.lane.b32.xlu0 %v133, 56
    %v541 = vpop.permute.xlu0 %540
    %v545 = vsel %vm227, %v537, 0
    %547 = vmatprep.subr.mxu0 0.0
    %548 = vmatpush1.msra.mxu0 %v539
    %549 = vmatprep.subr.mxu0 0.0
    %550 = vmatpush1.msra.mxu0 %v541
    %551 = vmatprep.subr.mxu0 0.0
    %552 = vmatpush1.msra.mxu0 0.0
    %553 = vmatprep.subr.mxu0 0.0
    %554 = vmatpush1.msra.mxu0 0.0
    %555 = vmatprep.subr.mxu0 0.0
    %556 = vmatpush1.msra.mxu0 0.0
    %557 = vmatprep.subr.mxu0 0.0
    %558 = vmatpush1.msra.mxu0 0.0
    %559 = vmatprep.subr.mxu0 0.0
    %560 = vmatpush1.msra.mxu0 0.0
    %561 = vmatprep.subr.mxu0 0.0
    %562 = vmatpush1.msra.mxu0 0.0
    %563 = vmatprep.subr.mxu0 0.0
    %564 = vmatpush1.msra.mxu0 0.0
    %565 = vmatprep.subr.mxu0 0.0
    %566 = vmatpush1.msra.mxu0 0.0
    %567 = vmatprep.subr.mxu0 0.0
    %568 = vmatpush1.msra.mxu0 0.0
    %569 = vmatprep.subr.mxu0 0.0
    %570 = vmatpush1.msra.mxu0 0.0
    %571 = vmatprep.subr.mxu0 0.0
    %572 = vmatpush1.msra.mxu0 0.0
    %573 = vmatprep.subr.mxu0 0.0
    %574 = vmatpush1.msra.mxu0 0.0
    %575 = vmatprep.subr.mxu0 0.0
    %576 = vmatpush1.msra.mxu0 0.0
    %577 = vmatprep.subr.mxu0 0.0
    %578 = vmatpush1.msra.mxu0 0.0
    %579 = vmatprep.subr.mxu0 0.0
    %580 = vmatpush1.msra.mxu0 0.0
    %581 = vmatprep.subr.mxu0 0.0
    %582 = vmatpush1.msra.mxu0 0.0
    %583 = vmatprep.subr.mxu0 0.0
    %584 = vmatpush1.msra.mxu0 0.0
    %585 = vmatprep.subr.mxu0 0.0
    %586 = vmatpush1.msra.mxu0 0.0
    %587 = vmatprep.subr.mxu0 0.0
    %588 = vmatpush1.msra.mxu0 0.0
    %589 = vmatprep.subr.mxu0 0.0
    %590 = vmatpush1.msra.mxu0 0.0
    %591 = vmatprep.subr.mxu0 0.0
    %592 = vmatpush1.msra.mxu0 0.0
    %593 = vmatprep.subr.mxu0 0.0
    %594 = vmatpush1.msra.mxu0 0.0
    %595 = vmatprep.subr.mxu0 0.0
    %596 = vmatpush1.msra.mxu0 0.0
    %597 = vmatprep.subr.mxu0 0.0
    %598 = vmatpush1.msra.mxu0 0.0
    %599 = vmatprep.subr.mxu0 0.0
    %600 = vmatpush1.msra.mxu0 0.0
    %601 = vmatprep.subr.mxu0 0.0
    %602 = vmatpush1.msra.mxu0 0.0
    %603 = vmatprep.subr.mxu0 0.0
    %604 = vmatpush1.msra.mxu0 0.0
    %605 = vmatprep.subr.mxu0 0.0
    %606 = vmatpush1.msra.mxu0 0.0
    %607 = vmatprep.subr.mxu0 0.0
    %608 = vmatpush1.msra.mxu0 0.0
    %609 = vmatprep.subr.mxu0 0.0
    %610 = vmatpush1.msra.mxu0 0.0
    %611 = vmatprep.mubr.f32.mxu0 0.0
    %612 = vmatmul.mubr.f32.gmra.mrb[0].mxu0 %v545
    %v613 = vpop.f32.mrb[0].mxu0
    %v614 = vadd.f32 0.0, %v613
    %v615 = vpop.f32.mrb[0].mxu0
    %616 = vdwg.mxu0
    %v617 = vld [vmem:[#allocation5 + $0x28] sm:$0xff]
    %v619 = vsel %vm143, %v614, 0
    %621 = vmatprep.subr.mxu0 0.0
    %622 = vmatpush1.msra.mxu0 %v617
    %623 = vmatprep.subr.mxu0 0.0
    %624 = vmatpush1.msra.mxu0 0.0
    %625 = vmatprep.subr.mxu0 0.0
    %626 = vmatpush1.msra.mxu0 0.0
    %627 = vmatprep.subr.mxu0 0.0
    %628 = vmatpush1.msra.mxu0 0.0
    %629 = vmatprep.subr.mxu0 0.0
    %630 = vmatpush1.msra.mxu0 0.0
    %631 = vmatprep.subr.mxu0 0.0
    %632 = vmatpush1.msra.mxu0 0.0
    %633 = vmatprep.subr.mxu0 0.0
    %634 = vmatpush1.msra.mxu0 0.0
    %635 = vmatprep.subr.mxu0 0.0
    %636 = vmatpush1.msra.mxu0 0.0
    %637 = vmatprep.subr.mxu0 0.0
    %638 = vmatpush1.msra.mxu0 0.0
    %639 = vmatprep.subr.mxu0 0.0
    %640 = vmatpush1.msra.mxu0 0.0
    %641 = vmatprep.subr.mxu0 0.0
    %642 = vmatpush1.msra.mxu0 0.0
    %643 = vmatprep.subr.mxu0 0.0
    %644 = vmatpush1.msra.mxu0 0.0
    %645 = vmatprep.subr.mxu0 0.0
    %646 = vmatpush1.msra.mxu0 0.0
    %647 = vmatprep.subr.mxu0 0.0
    %648 = vmatpush1.msra.mxu0 0.0
    %649 = vmatprep.subr.mxu0 0.0
    %650 = vmatpush1.msra.mxu0 0.0
    %651 = vmatprep.subr.mxu0 0.0
    %652 = vmatpush1.msra.mxu0 0.0
    %653 = vmatprep.subr.mxu0 0.0
    %654 = vmatpush1.msra.mxu0 0.0
    %655 = vmatprep.subr.mxu0 0.0
    %656 = vmatpush1.msra.mxu0 0.0
    %657 = vmatprep.subr.mxu0 0.0
    %658 = vmatpush1.msra.mxu0 0.0
    %659 = vmatprep.subr.mxu0 0.0
    %660 = vmatpush1.msra.mxu0 0.0
    %661 = vmatprep.subr.mxu0 0.0
    %662 = vmatpush1.msra.mxu0 0.0
    %663 = vmatprep.subr.mxu0 0.0
    %664 = vmatpush1.msra.mxu0 0.0
    %665 = vmatprep.subr.mxu0 0.0
    %666 = vmatpush1.msra.mxu0 0.0
    %667 = vmatprep.subr.mxu0 0.0
    %668 = vmatpush1.msra.mxu0 0.0
    %669 = vmatprep.subr.mxu0 0.0
    %670 = vmatpush1.msra.mxu0 0.0
    %671 = vmatprep.subr.mxu0 0.0
    %672 = vmatpush1.msra.mxu0 0.0
    %673 = vmatprep.subr.mxu0 0.0
    %674 = vmatpush1.msra.mxu0 0.0
    %675 = vmatprep.subr.mxu0 0.0
    %676 = vmatpush1.msra.mxu0 0.0
    %677 = vmatprep.subr.mxu0 0.0
    %678 = vmatpush1.msra.mxu0 0.0
    %679 = vmatprep.subr.mxu0 0.0
    %680 = vmatpush1.msra.mxu0 0.0
    %681 = vmatprep.subr.mxu0 0.0
    %682 = vmatpush1.msra.mxu0 0.0
    %683 = vmatprep.subr.mxu0 0.0
    %684 = vmatpush1.msra.mxu0 0.0
    %685 = vmatprep.mubr.f32.mxu0 0.0
    %686 = vmatmul.mubr.f32.gmra.mrb[0].mxu0 %v619
    %v687 = vpop.f32.mrb[0].mxu0
    %v688 = vadd.f32 0.0, %v687
    %v689 = vpop.f32.mrb[0].mxu0
    %690 = vdwg.mxu0
    %v691 = vadd.f32 %v414, %v688
    %692 = vrot.lane.b32.xlu0 %v128, 112
    %v693 = vpop.permute.xlu0 %692
    %694 = vrot.lane.b32.xlu0 %v133, 112
    %v695 = vpop.permute.xlu0 %694
    %696 = vrot.lane.b32.xlu0 %v128, 80
    %v697 = vpop.permute.xlu0 %696
    %698 = vrot.lane.b32.xlu0 %v133, 80
    %v699 = vpop.permute.xlu0 %698
    %v700 = vsel %vm143, %v693, 0
    %v702 = vsel %vm143, %v695, 0
    %v704 = vsel %vm143, %v697, 0
    %v706 = vsel %vm143, %v699, 0
    %708 = vmatprep.subr.mxu0 0.0
    %709 = vmatpush1.xpose.msra.mxu0 %v704
    %710 = vmatprep.subr.mxu0 0.0
    %711 = vmatpush1.xpose.msra.mxu0 %v706
    %712 = vmatprep.subr.mxu0 0.0
    %713 = vmatpush1.xpose.msra.mxu0 0.0
    %714 = vmatprep.subr.mxu0 0.0
    %715 = vmatpush1.xpose.msra.mxu0 0.0
    %716 = vmatprep.subr.mxu0 0.0
    %717 = vmatpush1.xpose.msra.mxu0 0.0
    %718 = vmatprep.subr.mxu0 0.0
    %719 = vmatpush1.xpose.msra.mxu0 0.0
    %720 = vmatprep.subr.mxu0 0.0
    %721 = vmatpush1.xpose.msra.mxu0 0.0
    %722 = vmatprep.subr.mxu0 0.0
    %723 = vmatpush1.xpose.msra.mxu0 0.0
    %724 = vmatprep.subr.mxu0 0.0
    %725 = vmatpush1.xpose.msra.mxu0 0.0
    %726 = vmatprep.subr.mxu0 0.0
    %727 = vmatpush1.xpose.msra.mxu0 0.0
    %728 = vmatprep.subr.mxu0 0.0
    %729 = vmatpush1.xpose.msra.mxu0 0.0
    %730 = vmatprep.subr.mxu0 0.0
    %731 = vmatpush1.xpose.msra.mxu0 0.0
    %732 = vmatprep.subr.mxu0 0.0
    %733 = vmatpush1.xpose.msra.mxu0 0.0
    %734 = vmatprep.subr.mxu0 0.0
    %735 = vmatpush1.xpose.msra.mxu0 0.0
    %736 = vmatprep.subr.mxu0 0.0
    %737 = vmatpush1.xpose.msra.mxu0 0.0
    %738 = vmatprep.subr.mxu0 0.0
    %739 = vmatpush1.xpose.msra.mxu0 0.0
    %740 = vmatprep.subr.mxu0 0.0
    %741 = vmatpush1.xpose.msra.mxu0 0.0
    %742 = vmatprep.subr.mxu0 0.0
    %743 = vmatpush1.xpose.msra.mxu0 0.0
    %744 = vmatprep.subr.mxu0 0.0
    %745 = vmatpush1.xpose.msra.mxu0 0.0
    %746 = vmatprep.subr.mxu0 0.0
    %747 = vmatpush1.xpose.msra.mxu0 0.0
    %748 = vmatprep.subr.mxu0 0.0
    %749 = vmatpush1.xpose.msra.mxu0 0.0
    %750 = vmatprep.subr.mxu0 0.0
    %751 = vmatpush1.xpose.msra.mxu0 0.0
    %752 = vmatprep.subr.mxu0 0.0
    %753 = vmatpush1.xpose.msra.mxu0 0.0
    %754 = vmatprep.subr.mxu0 0.0
    %755 = vmatpush1.xpose.msra.mxu0 0.0
    %756 = vmatprep.subr.mxu0 0.0
    %757 = vmatpush1.xpose.msra.mxu0 0.0
    %758 = vmatprep.subr.mxu0 0.0
    %759 = vmatpush1.xpose.msra.mxu0 0.0
    %760 = vmatprep.subr.mxu0 0.0
    %761 = vmatpush1.xpose.msra.mxu0 0.0
    %762 = vmatprep.subr.mxu0 0.0
    %763 = vmatpush1.xpose.msra.mxu0 0.0
    %764 = vmatprep.subr.mxu0 0.0
    %765 = vmatpush1.xpose.msra.mxu0 0.0
    %766 = vmatprep.subr.mxu0 0.0
    %767 = vmatpush1.xpose.msra.mxu0 0.0
    %768 = vmatprep.subr.mxu0 0.0
    %769 = vmatpush1.xpose.msra.mxu0 0.0
    %770 = vmatprep.subr.mxu0 0.0
    %771 = vmatpush1.xpose.msra.mxu0 0.0
    %772 = vmatprep.mubr.f32.mxu0 0.0
    %773 = vmatmul.mubr.f32.gmra.mrb[0].mxu0 %v700
    %v774 = vpop.f32.mrb[0].mxu0
    %v775 = vadd.f32 0.0, %v774
    %v776 = vpop.f32.mrb[0].mxu0
    %777 = vmatprep.mubr.f32.mxu0 0.0
    %778 = vmatmul.mubr.f32.gmra.mrb[0].mxu0 %v702
    %v779 = vpop.f32.mrb[0].mxu0
    %v780 = vadd.f32 0.0, %v779
    %v781 = vpop.f32.mrb[0].mxu0
    %782 = vdwg.mxu0
    %v783 = vsel %vm227, %v775, -inf
    %784 = vmax.xlane.f32.xlu0 %v783
    %v785 = vpop.xlane.xlu0 %784
    %v786 = vsel %vm227, %v780, -inf
    %787 = vmax.xlane.f32.xlu0 %v786
    %v788 = vpop.xlane.xlu0 %787
    %v789 = vsub.f32 %v775, %v785
    %v790 = vsub.f32 %v780, %v788
    %v791 = vmul.f32 %v789, 1.442695
    %v792 = vpow.pop %v791
    %v793 = vmul.f32 %v790, 1.442695
    %v794 = vpow.pop %v793
    %v795 = vsel %vm227, %v792, 0.0
    %796 = vadd.xlane.f32.xlu0 %v795
    %v797 = vpop.xlane.xlu0 %796
    %v798 = vsel %vm227, %v794, 0.0
    %799 = vadd.xlane.f32.xlu0 %v798
    %v800 = vpop.xlane.xlu0 %799
    %v801 = vrcp.pop %v797
    %v802 = vrcp.pop %v800
    %v803 = vmul.f32 %v792, %v801
    %v804 = vmul.f32 %v794, %v802
    %v805 = vsel %vm227, %v803, 0.0
    %v806 = vsel %vm227, %v804, 0.0
    %v807 = vadd.f32 %v805, %v806
    %v808 = vrot.slane %v807, 4
    %v809 = vadd.f32 %v807, %v808
    %v810 = vrot.slane %v809, 2
    %v811 = vadd.f32 %v809, %v810
    %v812 = vrot.slane %v811, 1
    %v813 = vadd.f32 %v811, %v812
    %v814 = vmul.f32 %v813, %v259
    %815 = vrot.lane.b32.xlu0 %v128, 48
    %v816 = vpop.permute.xlu0 %815
    %817 = vrot.lane.b32.xlu0 %v133, 48
    %v818 = vpop.permute.xlu0 %817
    %v822 = vsel %vm227, %v814, 0
    %824 = vmatprep.subr.mxu0 0.0
    %825 = vmatpush1.msra.mxu0 %v816
    %826 = vmatprep.subr.mxu0 0.0
    %827 = vmatpush1.msra.mxu0 %v818
    %828 = vmatprep.subr.mxu0 0.0
    %829 = vmatpush1.msra.mxu0 0.0
    %830 = vmatprep.subr.mxu0 0.0
    %831 = vmatpush1.msra.mxu0 0.0
    %832 = vmatprep.subr.mxu0 0.0
    %833 = vmatpush1.msra.mxu0 0.0
    %834 = vmatprep.subr.mxu0 0.0
    %835 = vmatpush1.msra.mxu0 0.0
    %836 = vmatprep.subr.mxu0 0.0
    %837 = vmatpush1.msra.mxu0 0.0
    %838 = vmatprep.subr.mxu0 0.0
    %839 = vmatpush1.msra.mxu0 0.0
    %840 = vmatprep.subr.mxu0 0.0
    %841 = vmatpush1.msra.mxu0 0.0
    %842 = vmatprep.subr.mxu0 0.0
    %843 = vmatpush1.msra.mxu0 0.0
    %844 = vmatprep.subr.mxu0 0.0
    %845 = vmatpush1.msra.mxu0 0.0
    %846 = vmatprep.subr.mxu0 0.0
    %847 = vmatpush1.msra.mxu0 0.0
    %848 = vmatprep.subr.mxu0 0.0
    %849 = vmatpush1.msra.mxu0 0.0
    %850 = vmatprep.subr.mxu0 0.0
    %851 = vmatpush1.msra.mxu0 0.0
    %852 = vmatprep.subr.mxu0 0.0
    %853 = vmatpush1.msra.mxu0 0.0
    %854 = vmatprep.subr.mxu0 0.0
    %855 = vmatpush1.msra.mxu0 0.0
    %856 = vmatprep.subr.mxu0 0.0
    %857 = vmatpush1.msra.mxu0 0.0
    %858 = vmatprep.subr.mxu0 0.0
    %859 = vmatpush1.msra.mxu0 0.0
    %860 = vmatprep.subr.mxu0 0.0
    %861 = vmatpush1.msra.mxu0 0.0
    %862 = vmatprep.subr.mxu0 0.0
    %863 = vmatpush1.msra.mxu0 0.0
    %864 = vmatprep.subr.mxu0 0.0
    %865 = vmatpush1.msra.mxu0 0.0
    %866 = vmatprep.subr.mxu0 0.0
    %867 = vmatpush1.msra.mxu0 0.0
    %868 = vmatprep.subr.mxu0 0.0
    %869 = vmatpush1.msra.mxu0 0.0
    %870 = vmatprep.subr.mxu0 0.0
    %871 = vmatpush1.msra.mxu0 0.0
    %872 = vmatprep.subr.mxu0 0.0
    %873 = vmatpush1.msra.mxu0 0.0
    %874 = vmatprep.subr.mxu0 0.0
    %875 = vmatpush1.msra.mxu0 0.0
    %876 = vmatprep.subr.mxu0 0.0
    %877 = vmatpush1.msra.mxu0 0.0
    %878 = vmatprep.subr.mxu0 0.0
    %879 = vmatpush1.msra.mxu0 0.0
    %880 = vmatprep.subr.mxu0 0.0
    %881 = vmatpush1.msra.mxu0 0.0
    %882 = vmatprep.subr.mxu0 0.0
    %883 = vmatpush1.msra.mxu0 0.0
    %884 = vmatprep.subr.mxu0 0.0
    %885 = vmatpush1.msra.mxu0 0.0
    %886 = vmatprep.subr.mxu0 0.0
    %887 = vmatpush1.msra.mxu0 0.0
    %888 = vmatprep.mubr.f32.mxu0 0.0
    %889 = vmatmul.mubr.f32.gmra.mrb[0].mxu0 %v822
    %v890 = vpop.f32.mrb[0].mxu0
    %v891 = vadd.f32 0.0, %v890
    %v892 = vpop.f32.mrb[0].mxu0
    %893 = vdwg.mxu0
    %v894 = vld [vmem:[#allocation5 + $0x30] sm:$0xff]
    %v896 = vsel %vm143, %v891, 0
    %898 = vmatprep.subr.mxu0 0.0
    %899 = vmatpush1.msra.mxu0 %v894
    %900 = vmatprep.subr.mxu0 0.0
    %901 = vmatpush1.msra.mxu0 0.0
    %902 = vmatprep.subr.mxu0 0.0
    %903 = vmatpush1.msra.mxu0 0.0
    %904 = vmatprep.subr.mxu0 0.0
    %905 = vmatpush1.msra.mxu0 0.0
    %906 = vmatprep.subr.mxu0 0.0
    %907 = vmatpush1.msra.mxu0 0.0
    %908 = vmatprep.subr.mxu0 0.0
    %909 = vmatpush1.msra.mxu0 0.0
    %910 = vmatprep.subr.mxu0 0.0
    %911 = vmatpush1.msra.mxu0 0.0
    %912 = vmatprep.subr.mxu0 0.0
    %913 = vmatpush1.msra.mxu0 0.0
    %914 = vmatprep.subr.mxu0 0.0
    %915 = vmatpush1.msra.mxu0 0.0
    %916 = vmatprep.subr.mxu0 0.0
    %917 = vmatpush1.msra.mxu0 0.0
    %918 = vmatprep.subr.mxu0 0.0
    %919 = vmatpush1.msra.mxu0 0.0
    %920 = vmatprep.subr.mxu0 0.0
    %921 = vmatpush1.msra.mxu0 0.0
    %922 = vmatprep.subr.mxu0 0.0
    %923 = vmatpush1.msra.mxu0 0.0
    %924 = vmatprep.subr.mxu0 0.0
    %925 = vmatpush1.msra.mxu0 0.0
    %926 = vmatprep.subr.mxu0 0.0
    %927 = vmatpush1.msra.mxu0 0.0
    %928 = vmatprep.subr.mxu0 0.0
    %929 = vmatpush1.msra.mxu0 0.0
    %930 = vmatprep.subr.mxu0 0.0
    %931 = vmatpush1.msra.mxu0 0.0
    %932 = vmatprep.subr.mxu0 0.0
    %933 = vmatpush1.msra.mxu0 0.0
    %934 = vmatprep.subr.mxu0 0.0
    %935 = vmatpush1.msra.mxu0 0.0
    %936 = vmatprep.subr.mxu0 0.0
    %937 = vmatpush1.msra.mxu0 0.0
    %938 = vmatprep.subr.mxu0 0.0
    %939 = vmatpush1.msra.mxu0 0.0
    %940 = vmatprep.subr.mxu0 0.0
    %941 = vmatpush1.msra.mxu0 0.0
    %942 = vmatprep.subr.mxu0 0.0
    %943 = vmatpush1.msra.mxu0 0.0
    %944 = vmatprep.subr.mxu0 0.0
    %945 = vmatpush1.msra.mxu0 0.0
    %946 = vmatprep.subr.mxu0 0.0
    %947 = vmatpush1.msra.mxu0 0.0
    %948 = vmatprep.subr.mxu0 0.0
    %949 = vmatpush1.msra.mxu0 0.0
    %950 = vmatprep.subr.mxu0 0.0
    %951 = vmatpush1.msra.mxu0 0.0
    %952 = vmatprep.subr.mxu0 0.0
    %953 = vmatpush1.msra.mxu0 0.0
    %954 = vmatprep.subr.mxu0 0.0
    %955 = vmatpush1.msra.mxu0 0.0
    %956 = vmatprep.subr.mxu0 0.0
    %957 = vmatpush1.msra.mxu0 0.0
    %958 = vmatprep.subr.mxu0 0.0
    %959 = vmatpush1.msra.mxu0 0.0
    %960 = vmatprep.subr.mxu0 0.0
    %961 = vmatpush1.msra.mxu0 0.0
    %962 = vmatprep.mubr.f32.mxu0 0.0
    %963 = vmatmul.mubr.f32.gmra.mrb[0].mxu0 %v896
    %v964 = vpop.f32.mrb[0].mxu0
    %v965 = vadd.f32 0.0, %v964
    %v966 = vpop.f32.mrb[0].mxu0
    %967 = vdwg.mxu0
    %v968 = vadd.f32 %v691, %v965
    %969 = vrot.lane.b32.xlu0 %v128, 104
    %v970 = vpop.permute.xlu0 %969
    %971 = vrot.lane.b32.xlu0 %v133, 104
    %v972 = vpop.permute.xlu0 %971
    %973 = vrot.lane.b32.xlu0 %v128, 72
    %v974 = vpop.permute.xlu0 %973
    %975 = vrot.lane.b32.xlu0 %v133, 72
    %v976 = vpop.permute.xlu0 %975
    %v977 = vsel %vm143, %v970, 0
    %v979 = vsel %vm143, %v972, 0
    %v981 = vsel %vm143, %v974, 0
    %v983 = vsel %vm143, %v976, 0
    %985 = vmatprep.subr.mxu0 0.0
    %986 = vmatpush1.xpose.msra.mxu0 %v981
    %987 = vmatprep.subr.mxu0 0.0
    %988 = vmatpush1.xpose.msra.mxu0 %v983
    %989 = vmatprep.subr.mxu0 0.0
    %990 = vmatpush1.xpose.msra.mxu0 0.0
    %991 = vmatprep.subr.mxu0 0.0
    %992 = vmatpush1.xpose.msra.mxu0 0.0
    %993 = vmatprep.subr.mxu0 0.0
    %994 = vmatpush1.xpose.msra.mxu0 0.0
    %995 = vmatprep.subr.mxu0 0.0
    %996 = vmatpush1.xpose.msra.mxu0 0.0
    %997 = vmatprep.subr.mxu0 0.0
    %998 = vmatpush1.xpose.msra.mxu0 0.0
    %999 = vmatprep.subr.mxu0 0.0
    %1000 = vmatpush1.xpose.msra.mxu0 0.0
    %1001 = vmatprep.subr.mxu0 0.0
    %1002 = vmatpush1.xpose.msra.mxu0 0.0
    %1003 = vmatprep.subr.mxu0 0.0
    %1004 = vmatpush1.xpose.msra.mxu0 0.0
    %1005 = vmatprep.subr.mxu0 0.0
    %1006 = vmatpush1.xpose.msra.mxu0 0.0
    %1007 = vmatprep.subr.mxu0 0.0
    %1008 = vmatpush1.xpose.msra.mxu0 0.0
    %1009 = vmatprep.subr.mxu0 0.0
    %1010 = vmatpush1.xpose.msra.mxu0 0.0
    %1011 = vmatprep.subr.mxu0 0.0
    %1012 = vmatpush1.xpose.msra.mxu0 0.0
    %1013 = vmatprep.subr.mxu0 0.0
    %1014 = vmatpush1.xpose.msra.mxu0 0.0
    %1015 = vmatprep.subr.mxu0 0.0
    %1016 = vmatpush1.xpose.msra.mxu0 0.0
    %1017 = vmatprep.subr.mxu0 0.0
    %1018 = vmatpush1.xpose.msra.mxu0 0.0
    %1019 = vmatprep.subr.mxu0 0.0
    %1020 = vmatpush1.xpose.msra.mxu0 0.0
    %1021 = vmatprep.subr.mxu0 0.0
    %1022 = vmatpush1.xpose.msra.mxu0 0.0
    %1023 = vmatprep.subr.mxu0 0.0
    %1024 = vmatpush1.xpose.msra.mxu0 0.0
    %1025 = vmatprep.subr.mxu0 0.0
    %1026 = vmatpush1.xpose.msra.mxu0 0.0
    %1027 = vmatprep.subr.mxu0 0.0
    %1028 = vmatpush1.xpose.msra.mxu0 0.0
    %1029 = vmatprep.subr.mxu0 0.0
    %1030 = vmatpush1.xpose.msra.mxu0 0.0
    %1031 = vmatprep.subr.mxu0 0.0
    %1032 = vmatpush1.xpose.msra.mxu0 0.0
    %1033 = vmatprep.subr.mxu0 0.0
    %1034 = vmatpush1.xpose.msra.mxu0 0.0
    %1035 = vmatprep.subr.mxu0 0.0
    %1036 = vmatpush1.xpose.msra.mxu0 0.0
    %1037 = vmatprep.subr.mxu0 0.0
    %1038 = vmatpush1.xpose.msra.mxu0 0.0
    %1039 = vmatprep.subr.mxu0 0.0
    %1040 = vmatpush1.xpose.msra.mxu0 0.0
    %1041 = vmatprep.subr.mxu0 0.0
    %1042 = vmatpush1.xpose.msra.mxu0 0.0
    %1043 = vmatprep.subr.mxu0 0.0
    %1044 = vmatpush1.xpose.msra.mxu0 0.0
    %1045 = vmatprep.subr.mxu0 0.0
    %1046 = vmatpush1.xpose.msra.mxu0 0.0
    %1047 = vmatprep.subr.mxu0 0.0
    %1048 = vmatpush1.xpose.msra.mxu0 0.0
    %1049 = vmatprep.mubr.f32.mxu0 0.0
    %1050 = vmatmul.mubr.f32.gmra.mrb[0].mxu0 %v977
    %v1051 = vpop.f32.mrb[0].mxu0
    %v1052 = vadd.f32 0.0, %v1051
    %v1053 = vpop.f32.mrb[0].mxu0
    %1054 = vmatprep.mubr.f32.mxu0 0.0
    %1055 = vmatmul.mubr.f32.gmra.mrb[0].mxu0 %v979
    %v1056 = vpop.f32.mrb[0].mxu0
    %v1057 = vadd.f32 0.0, %v1056
    %v1058 = vpop.f32.mrb[0].mxu0
    %1059 = vdwg.mxu0
    %v1060 = vsel %vm227, %v1052, -inf
    %1061 = vmax.xlane.f32.xlu0 %v1060
    %v1062 = vpop.xlane.xlu0 %1061
    %v1063 = vsel %vm227, %v1057, -inf
    %1064 = vmax.xlane.f32.xlu0 %v1063
    %v1065 = vpop.xlane.xlu0 %1064
    %v1066 = vsub.f32 %v1052, %v1062
    %v1067 = vsub.f32 %v1057, %v1065
    %v1068 = vmul.f32 %v1066, 1.442695
    %v1069 = vpow.pop %v1068
    %v1070 = vmul.f32 %v1067, 1.442695
    %v1071 = vpow.pop %v1070
    %v1072 = vsel %vm227, %v1069, 0.0
    %1073 = vadd.xlane.f32.xlu0 %v1072
    %v1074 = vpop.xlane.xlu0 %1073
    %v1075 = vsel %vm227, %v1071, 0.0
    %1076 = vadd.xlane.f32.xlu0 %v1075
    %v1077 = vpop.xlane.xlu0 %1076
    %v1078 = vrcp.pop %v1074
    %v1079 = vrcp.pop %v1077
    %v1080 = vmul.f32 %v1069, %v1078
    %v1081 = vmul.f32 %v1071, %v1079
    %v1082 = vsel %vm227, %v1080, 0.0
    %v1083 = vsel %vm227, %v1081, 0.0
    %v1084 = vadd.f32 %v1082, %v1083
    %v1085 = vrot.slane %v1084, 4
    %v1086 = vadd.f32 %v1084, %v1085
    %v1087 = vrot.slane %v1086, 2
    %v1088 = vadd.f32 %v1086, %v1087
    %v1089 = vrot.slane %v1088, 1
    %v1090 = vadd.f32 %v1088, %v1089
    %v1091 = vmul.f32 %v1090, %v259
    %1092 = vrot.lane.b32.xlu0 %v128, 40
    %v1093 = vpop.permute.xlu0 %1092
    %1094 = vrot.lane.b32.xlu0 %v133, 40
    %v1095 = vpop.permute.xlu0 %1094
    %v1099 = vsel %vm227, %v1091, 0
    %1101 = vmatprep.subr.mxu0 0.0
    %1102 = vmatpush1.msra.mxu0 %v1093
    %1103 = vmatprep.subr.mxu0 0.0
    %1104 = vmatpush1.msra.mxu0 %v1095
    %1105 = vmatprep.subr.mxu0 0.0
    %1106 = vmatpush1.msra.mxu0 0.0
    %1107 = vmatprep.subr.mxu0 0.0
    %1108 = vmatpush1.msra.mxu0 0.0
    %1109 = vmatprep.subr.mxu0 0.0
    %1110 = vmatpush1.msra.mxu0 0.0
    %1111 = vmatprep.subr.mxu0 0.0
    %1112 = vmatpush1.msra.mxu0 0.0
    %1113 = vmatprep.subr.mxu0 0.0
    %1114 = vmatpush1.msra.mxu0 0.0
    %1115 = vmatprep.subr.mxu0 0.0
    %1116 = vmatpush1.msra.mxu0 0.0
    %1117 = vmatprep.subr.mxu0 0.0
    %1118 = vmatpush1.msra.mxu0 0.0
    %1119 = vmatprep.subr.mxu0 0.0
    %1120 = vmatpush1.msra.mxu0 0.0
    %1121 = vmatprep.subr.mxu0 0.0
    %1122 = vmatpush1.msra.mxu0 0.0
    %1123 = vmatprep.subr.mxu0 0.0
    %1124 = vmatpush1.msra.mxu0 0.0
    %1125 = vmatprep.subr.mxu0 0.0
    %1126 = vmatpush1.msra.mxu0 0.0
    %1127 = vmatprep.subr.mxu0 0.0
    %1128 = vmatpush1.msra.mxu0 0.0
    %1129 = vmatprep.subr.mxu0 0.0
    %1130 = vmatpush1.msra.mxu0 0.0
    %1131 = vmatprep.subr.mxu0 0.0
    %1132 = vmatpush1.msra.mxu0 0.0
    %1133 = vmatprep.subr.mxu0 0.0
    %1134 = vmatpush1.msra.mxu0 0.0
    %1135 = vmatprep.subr.mxu0 0.0
    %1136 = vmatpush1.msra.mxu0 0.0
    %1137 = vmatprep.subr.mxu0 0.0
    %1138 = vmatpush1.msra.mxu0 0.0
    %1139 = vmatprep.subr.mxu0 0.0
    %1140 = vmatpush1.msra.mxu0 0.0
    %1141 = vmatprep.subr.mxu0 0.0
    %1142 = vmatpush1.msra.mxu0 0.0
    %1143 = vmatprep.subr.mxu0 0.0
    %1144 = vmatpush1.msra.mxu0 0.0
    %1145 = vmatprep.subr.mxu0 0.0
    %1146 = vmatpush1.msra.mxu0 0.0
    %1147 = vmatprep.subr.mxu0 0.0
    %1148 = vmatpush1.msra.mxu0 0.0
    %1149 = vmatprep.subr.mxu0 0.0
    %1150 = vmatpush1.msra.mxu0 0.0
    %1151 = vmatprep.subr.mxu0 0.0
    %1152 = vmatpush1.msra.mxu0 0.0
    %1153 = vmatprep.subr.mxu0 0.0
    %1154 = vmatpush1.msra.mxu0 0.0
    %1155 = vmatprep.subr.mxu0 0.0
    %1156 = vmatpush1.msra.mxu0 0.0
    %1157 = vmatprep.subr.mxu0 0.0
    %1158 = vmatpush1.msra.mxu0 0.0
    %1159 = vmatprep.subr.mxu0 0.0
    %1160 = vmatpush1.msra.mxu0 0.0
    %1161 = vmatprep.subr.mxu0 0.0
    %1162 = vmatpush1.msra.mxu0 0.0
    %1163 = vmatprep.subr.mxu0 0.0
    %1164 = vmatpush1.msra.mxu0 0.0
    %1165 = vmatprep.mubr.f32.mxu0 0.0
    %1166 = vmatmul.mubr.f32.gmra.mrb[0].mxu0 %v1099
    %v1167 = vpop.f32.mrb[0].mxu0
    %v1168 = vadd.f32 0.0, %v1167
    %v1169 = vpop.f32.mrb[0].mxu0
    %1170 = vdwg.mxu0
    %v1171 = vld [vmem:[#allocation5 + $0x38] sm:$0xff]
    %v1173 = vsel %vm143, %v1168, 0
    %1175 = vmatprep.subr.mxu0 0.0
    %1176 = vmatpush1.msra.mxu0 %v1171
    %1177 = vmatprep.subr.mxu0 0.0
    %1178 = vmatpush1.msra.mxu0 0.0
    %1179 = vmatprep.subr.mxu0 0.0
    %1180 = vmatpush1.msra.mxu0 0.0
    %1181 = vmatprep.subr.mxu0 0.0
    %1182 = vmatpush1.msra.mxu0 0.0
    %1183 = vmatprep.subr.mxu0 0.0
    %1184 = vmatpush1.msra.mxu0 0.0
    %1185 = vmatprep.subr.mxu0 0.0
    %1186 = vmatpush1.msra.mxu0 0.0
    %1187 = vmatprep.subr.mxu0 0.0
    %1188 = vmatpush1.msra.mxu0 0.0
    %1189 = vmatprep.subr.mxu0 0.0
    %1190 = vmatpush1.msra.mxu0 0.0
    %1191 = vmatprep.subr.mxu0 0.0
    %1192 = vmatpush1.msra.mxu0 0.0
    %1193 = vmatprep.subr.mxu0 0.0
    %1194 = vmatpush1.msra.mxu0 0.0
    %1195 = vmatprep.subr.mxu0 0.0
    %1196 = vmatpush1.msra.mxu0 0.0
    %1197 = vmatprep.subr.mxu0 0.0
    %1198 = vmatpush1.msra.mxu0 0.0
    %1199 = vmatprep.subr.mxu0 0.0
    %1200 = vmatpush1.msra.mxu0 0.0
    %1201 = vmatprep.subr.mxu0 0.0
    %1202 = vmatpush1.msra.mxu0 0.0
    %1203 = vmatprep.subr.mxu0 0.0
    %1204 = vmatpush1.msra.mxu0 0.0
    %1205 = vmatprep.subr.mxu0 0.0
    %1206 = vmatpush1.msra.mxu0 0.0
    %1207 = vmatprep.subr.mxu0 0.0
    %1208 = vmatpush1.msra.mxu0 0.0
    %1209 = vmatprep.subr.mxu0 0.0
    %1210 = vmatpush1.msra.mxu0 0.0
    %1211 = vmatprep.subr.mxu0 0.0
    %1212 = vmatpush1.msra.mxu0 0.0
    %1213 = vmatprep.subr.mxu0 0.0
    %1214 = vmatpush1.msra.mxu0 0.0
    %1215 = vmatprep.subr.mxu0 0.0
    %1216 = vmatpush1.msra.mxu0 0.0
    %1217 = vmatprep.subr.mxu0 0.0
    %1218 = vmatpush1.msra.mxu0 0.0
    %1219 = vmatprep.subr.mxu0 0.0
    %1220 = vmatpush1.msra.mxu0 0.0
    %1221 = vmatprep.subr.mxu0 0.0
    %1222 = vmatpush1.msra.mxu0 0.0
    %1223 = vmatprep.subr.mxu0 0.0
    %1224 = vmatpush1.msra.mxu0 0.0
    %1225 = vmatprep.subr.mxu0 0.0
    %1226 = vmatpush1.msra.mxu0 0.0
    %1227 = vmatprep.subr.mxu0 0.0
    %1228 = vmatpush1.msra.mxu0 0.0
    %1229 = vmatprep.subr.mxu0 0.0
    %1230 = vmatpush1.msra.mxu0 0.0
    %1231 = vmatprep.subr.mxu0 0.0
    %1232 = vmatpush1.msra.mxu0 0.0
    %1233 = vmatprep.subr.mxu0 0.0
    %1234 = vmatpush1.msra.mxu0 0.0
    %1235 = vmatprep.subr.mxu0 0.0
    %1236 = vmatpush1.msra.mxu0 0.0
    %1237 = vmatprep.subr.mxu0 0.0
    %1238 = vmatpush1.msra.mxu0 0.0
    %1239 = vmatprep.mubr.f32.mxu0 0.0
    %1240 = vmatmul.mubr.f32.gmra.mrb[0].mxu0 %v1173
    %v1241 = vpop.f32.mrb[0].mxu0
    %v1242 = vadd.f32 0.0, %v1241
    %v1243 = vpop.f32.mrb[0].mxu0
    %1244 = vdwg.mxu0
    %v1245 = vadd.f32 %v968, %v1242
    %v1246 = vld [vmem:[#allocation5 + $0x40] sm:$0xff]
    %v1247 = vld [vmem:[#allocation5 + $0x48] sm:$0xff]
    %v1248 = vld [vmem:[#allocation5 + $0x50] sm:$0xff]
    %v1249 = vld [vmem:[#allocation5 + $0x58] sm:$0xff]
    %v1250 = vld [vmem:[%s2 + $0x2] sm:$0x1]
    %v1252 = vsel %vm54, %v1245, 0
    %1254 = vmatprep.subr.mxu0 0.0
    %1255 = vmatpush1.msra.mxu0 %v1246
    %1256 = vmatprep.subr.mxu0 0.0
    %1257 = vmatpush1.msra.mxu0 %v1247
    %1258 = vmatprep.subr.mxu0 0.0
    %1259 = vmatpush1.msra.mxu0 %v1248
    %1260 = vmatprep.subr.mxu0 0.0
    %1261 = vmatpush1.msra.mxu0 %v1249
    %1262 = vmatprep.subr.mxu0 0.0
    %1263 = vmatpush1.msra.mxu0 0.0
    %1264 = vmatprep.subr.mxu0 0.0
    %1265 = vmatpush1.msra.mxu0 0.0
    %1266 = vmatprep.subr.mxu0 0.0
    %1267 = vmatpush1.msra.mxu0 0.0
    %1268 = vmatprep.subr.mxu0 0.0
    %1269 = vmatpush1.msra.mxu0 0.0
    %1270 = vmatprep.subr.mxu0 0.0
    %1271 = vmatpush1.msra.mxu0 0.0
    %1272 = vmatprep.subr.mxu0 0.0
    %1273 = vmatpush1.msra.mxu0 0.0
    %1274 = vmatprep.subr.mxu0 0.0
    %1275 = vmatpush1.msra.mxu0 0.0
    %1276 = vmatprep.subr.mxu0 0.0
    %1277 = vmatpush1.msra.mxu0 0.0
    %1278 = vmatprep.subr.mxu0 0.0
    %1279 = vmatpush1.msra.mxu0 0.0
    %1280 = vmatprep.subr.mxu0 0.0
    %1281 = vmatpush1.msra.mxu0 0.0
    %1282 = vmatprep.subr.mxu0 0.0
    %1283 = vmatpush1.msra.mxu0 0.0
    %1284 = vmatprep.subr.mxu0 0.0
    %1285 = vmatpush1.msra.mxu0 0.0
    %1286 = vmatprep.subr.mxu0 0.0
    %1287 = vmatpush1.msra.mxu0 0.0
    %1288 = vmatprep.subr.mxu0 0.0
    %1289 = vmatpush1.msra.mxu0 0.0
    %1290 = vmatprep.subr.mxu0 0.0
    %1291 = vmatpush1.msra.mxu0 0.0
    %1292 = vmatprep.subr.mxu0 0.0
    %1293 = vmatpush1.msra.mxu0 0.0
    %1294 = vmatprep.subr.mxu0 0.0
    %1295 = vmatpush1.msra.mxu0 0.0
    %1296 = vmatprep.subr.mxu0 0.0
    %1297 = vmatpush1.msra.mxu0 0.0
    %1298 = vmatprep.subr.mxu0 0.0
    %1299 = vmatpush1.msra.mxu0 0.0
    %1300 = vmatprep.subr.mxu0 0.0
    %1301 = vmatpush1.msra.mxu0 0.0
    %1302 = vmatprep.subr.mxu0 0.0
    %1303 = vmatpush1.msra.mxu0 0.0
    %1304 = vmatprep.subr.mxu0 0.0
    %1305 = vmatpush1.msra.mxu0 0.0
    %1306 = vmatprep.subr.mxu0 0.0
    %1307 = vmatpush1.msra.mxu0 0.0
    %1308 = vmatprep.subr.mxu0 0.0
    %1309 = vmatpush1.msra.mxu0 0.0
    %1310 = vmatprep.subr.mxu0 0.0
    %1311 = vmatpush1.msra.mxu0 0.0
    %1312 = vmatprep.subr.mxu0 0.0
    %1313 = vmatpush1.msra.mxu0 0.0
    %1314 = vmatprep.subr.mxu0 0.0
    %1315 = vmatpush1.msra.mxu0 0.0
    %1316 = vmatprep.subr.mxu0 0.0
    %1317 = vmatpush1.msra.mxu0 0.0
    %1318 = vmatprep.mubr.f32.mxu0 0.0
    %1319 = vmatmul.mubr.f32.gmra.mrb[0].mxu0 %v1252
    %v1320 = vpop.f32.mrb[0].mxu0
    %v1321 = vadd.f32 %v1250, %v1320
    %v1322 = vpop.f32.mrb[0].mxu0
    %1323 = vdwg.mxu0
    %v1324 = vmul.f32 %v1321, 0.5
    %v1325 = vmul.f32 %v1321, 0.044715
    %v1326 = vmul.f32 %v1325, %v1321
    %v1327 = vmul.f32 %v1326, %v1321
    %v1328 = vadd.f32 %v1321, %v1327
    %v1329 = vmul.f32 %v1328, 0.7978846
    %v1330 = vtanh.pop %v1329
    %v1331 = vadd.f32 %v1330, 1.0
    %v1332 = vmul.f32 %v1324, %v1331
    %v1333 = vld [vmem:[#allocation5 + $0x60] sm:$0xff]
    %v1334 = vld [vmem:[#allocation5 + $0x68] sm:$0xff]
    %v1335 = vld [vmem:[#allocation5 + $0x70] sm:$0xff]
    %v1336 = vld [vmem:[#allocation5 + $0x78] sm:$0xff]
    %v1337 = vld [vmem:[#allocation5 + $0x80] sm:$0xff]
    %v1338 = vld [vmem:[#allocation5 + $0x88] sm:$0xff]
    %v1339 = vld [vmem:[#allocation5 + $0x90] sm:$0xff]
    %v1340 = vld [vmem:[#allocation5 + $0x98] sm:$0xff]
    %v1341 = vld [vmem:[%s2 + $0x3] sm:$0x1]
    %vm1342 = vcmask 523264
    %v1344 = vsel %vm1342, %v1332, 0
    %1346 = vmatprep.subr.mxu0 0.0
    %1347 = vmatpush1.msra.mxu0 %v1333
    %1348 = vmatprep.subr.mxu0 0.0
    %1349 = vmatpush1.msra.mxu0 %v1334
    %1350 = vmatprep.subr.mxu0 0.0
    %1351 = vmatpush1.msra.mxu0 %v1335
    %1352 = vmatprep.subr.mxu0 0.0
    %1353 = vmatpush1.msra.mxu0 %v1336
    %1354 = vmatprep.subr.mxu0 0.0
    %1355 = vmatpush1.msra.mxu0 %v1337
    %1356 = vmatprep.subr.mxu0 0.0
    %1357 = vmatpush1.msra.mxu0 %v1338
    %1358 = vmatprep.subr.mxu0 0.0
    %1359 = vmatpush1.msra.mxu0 %v1339
    %1360 = vmatprep.subr.mxu0 0.0
    %1361 = vmatpush1.msra.mxu0 %v1340
    %1362 = vmatprep.subr.mxu0 0.0
    %1363 = vmatpush1.msra.mxu0 0.0
    %1364 = vmatprep.subr.mxu0 0.0
    %1365 = vmatpush1.msra.mxu0 0.0
    %1366 = vmatprep.subr.mxu0 0.0
    %1367 = vmatpush1.msra.mxu0 0.0
    %1368 = vmatprep.subr.mxu0 0.0
    %1369 = vmatpush1.msra.mxu0 0.0
    %1370 = vmatprep.subr.mxu0 0.0
    %1371 = vmatpush1.msra.mxu0 0.0
    %1372 = vmatprep.subr.mxu0 0.0
    %1373 = vmatpush1.msra.mxu0 0.0
    %1374 = vmatprep.subr.mxu0 0.0
    %1375 = vmatpush1.msra.mxu0 0.0
    %1376 = vmatprep.subr.mxu0 0.0
    %1377 = vmatpush1.msra.mxu0 0.0
    %1378 = vmatprep.subr.mxu0 0.0
    %1379 = vmatpush1.msra.mxu0 0.0
    %1380 = vmatprep.subr.mxu0 0.0
    %1381 = vmatpush1.msra.mxu0 0.0
    %1382 = vmatprep.subr.mxu0 0.0
    %1383 = vmatpush1.msra.mxu0 0.0
    %1384 = vmatprep.subr.mxu0 0.0
    %1385 = vmatpush1.msra.mxu0 0.0
    %1386 = vmatprep.subr.mxu0 0.0
    %1387 = vmatpush1.msra.mxu0 0.0
    %1388 = vmatprep.subr.mxu0 0.0
    %1389 = vmatpush1.msra.mxu0 0.0
    %1390 = vmatprep.subr.mxu0 0.0
    %1391 = vmatpush1.msra.mxu0 0.0
    %1392 = vmatprep.subr.mxu0 0.0
    %1393 = vmatpush1.msra.mxu0 0.0
    %1394 = vmatprep.subr.mxu0 0.0
    %1395 = vmatpush1.msra.mxu0 0.0
    %1396 = vmatprep.subr.mxu0 0.0
    %1397 = vmatpush1.msra.mxu0 0.0
    %1398 = vmatprep.subr.mxu0 0.0
    %1399 = vmatpush1.msra.mxu0 0.0
    %1400 = vmatprep.subr.mxu0 0.0
    %1401 = vmatpush1.msra.mxu0 0.0
    %1402 = vmatprep.subr.mxu0 0.0
    %1403 = vmatpush1.msra.mxu0 0.0
    %1404 = vmatprep.subr.mxu0 0.0
    %1405 = vmatpush1.msra.mxu0 0.0
    %1406 = vmatprep.subr.mxu0 0.0
    %1407 = vmatpush1.msra.mxu0 0.0
    %1408 = vmatprep.subr.mxu0 0.0
    %1409 = vmatpush1.msra.mxu0 0.0
    %1410 = vmatprep.mubr.f32.mxu0 0.0
    %1411 = vmatmul.mubr.f32.gmra.mrb[0].mxu0 %v1344
    %v1412 = vpop.f32.mrb[0].mxu0
    %v1413 = vadd.f32 %v1341, %v1412
    %v1414 = vpop.f32.mrb[0].mxu0
    %1415 = vdwg.mxu0
    %vm1416 = vcmask 1040384
    %v1417 = vsel %vm1416, %v1413, -inf
    %1418 = vmax.xlane.f32.xlu0 %v1417
    %v1419 = vpop.xlane.xlu0 %1418
    %v1420 = vsub.f32 %v1413, %v1419
    %v1421 = vmul.f32 %v1420, 1.442695
    %v1422 = vpow.pop %v1421
    %v1423 = vsel %vm1416, %v1422, 0.0
    %1424 = vadd.xlane.f32.xlu0 %v1423
    %v1425 = vpop.xlane.xlu0 %1424
    %v1426 = vrcp.pop %v1425
    %v1427 = vmul.f32 %v1422, %v1426
    %1428 = vst [vmem:[#allocation7] sm:$0x1] %v1427
    // Predicated region
    $region22: #{tpu_custom_call.1} parent=1 // pred_check
      _
    $region23: #{tpu_custom_call.1} parent=1 // pred_check_branch
      %1430 = sbr.rel (0) target = $region25
    $region24: #{tpu_custom_call.1} parent=1 // pred_region
      %s1432 = ssub.s32 16, 16
      %1433 = vsyncadd [#allocation4], %s1432
      %s1435 = sshll.u32 [#allocation7], 4
      %s1436 = int_to_ptr.vmem [resolvable:$true] %s1435
      %1438 = dma.vmem_to_hbm [thread:$0]  %s1436, 16, %s3, [#allocation4]
    $region25: #{tpu_custom_call.1} parent=1 // pred_fallthru
      _
    // Predicated region
    $region26: #{tpu_custom_call.1} parent=1 // pred_check
      _
    $region27: #{tpu_custom_call.1} parent=1 // pred_check_branch
      %1440 = sbr.rel (0) target = $region29
    $region28: #{tpu_custom_call.1} parent=1 // pred_region
      %1441 = dma.done [#allocation4], 16
    $region29: #{tpu_custom_call.1} parent=1 // pred_fallthru
      _
    %1442 = vsyncpa [#allocation3], 1
    %1443 = vsyncpa [#allocation6], 1
    %1444 = vsyncpa [#allocation4], 1

</llo_original>
